<compile_context>
chip_gen: v7x
topology: tpu7x:2x2x1
jax: 0.10.0
libtpu: 0.0.40
codegen_flags: <defaults>
</compile_context>

<pallas_src>
import jax
import jax.numpy as jnp
from jax import lax
from jax.experimental import pallas as pl
from jax.experimental.pallas import tpu as pltpu
import numpy as np


# ----------------------------------------------------------------------------
# Pallas kernel
# ----------------------------------------------------------------------------
def make_vad_kernel(num_conv, t, l, neg_slope):
    """num_conv leaky-relu'd convs plus one 'end' conv, channels-on-sublanes."""

    def conv5(h, w_ref, bias, masks):
        # h: (Cin, L) slab; w_ref: (5, Cout, Cin); bias: (Cout, L) with the
        # embedding contribution already folded in (glue-side).
        cin = h.shape[0]
        acc = bias
        for k in range(5):
            d = k - 2
            if d == 0:
                hk = h
            else:
                # shifted[cin, pos] = h[cin, pos + d] within each length-T
                # frame segment, zero outside (conv zero padding).
                rolled = pltpu.roll(h, (-d) % l, axis=1)
                hk = jnp.where(masks[d], rolled, 0.0)
            wk = w_ref[k]                                     # (Cout, Cin)
            if cin == 1:
                acc = acc + wk * hk                           # outer product (VPU)
            else:
                acc = acc + jnp.dot(wk, hk,
                                    preferred_element_type=jnp.float32)
        return acc

    def kernel(x_ref, *refs):
        o_ref = refs[-1]
        wbs = refs[:-1]                                       # w0,b0,...,w_end,b_end

        # Per-lane frame position within its segment; tap-validity masks.
        t_idx = lax.broadcasted_iota(jnp.int32, (1, l), 1) % t
        masks = {d: (t_idx + d >= 0) & (t_idx + d < t) for d in (-2, -1, 1, 2)}

        # TODO(synk): nn.Dropout is treated as identity (eval-mode semantics).
        h = x_ref[...]                                        # (1, L), lane-dense
        for i in range(num_conv):
            bias = wbs[2 * i + 1][...]                        # (Cout, L)
            h = conv5(h, wbs[2 * i], bias, masks)
            h = jnp.where(h >= 0.0, h, neg_slope * h)         # LeakyReLU
        b_end = wbs[2 * num_conv + 1][...]                    # (1, L)
        o_ref[...] = conv5(h, wbs[2 * num_conv], b_end, masks)

    return kernel


# ----------------------------------------------------------------------------
# Wrapper (glue: lane-dense reshapes, embedding/bias fold, BlockSpecs)
# ----------------------------------------------------------------------------
def vadnet_pallas(x, params, emb_table, *, neg_slope=0.1, nb=None):
    B, F, T = x.shape
    N = B * F
    E = emb_table.shape[1]
    f32 = jnp.float32

    if nb is None:
        # Two grid blocks (one per TensorCore on v7x); near-free on v5e/v6e.
        half = N // 2
        if N % 2 == 0 and half % F == 0 and (half * T) % 128 == 0:
            nb = half
        else:
            nb = N
    assert N % nb == 0 and nb % F == 0
    L = nb * T
    assert L % 128 == 0, "lane dim must be a multiple of 128 for lane-dense I/O"
    G = N // nb

    # Lane-dense input: block g holds rows [g*nb, (g+1)*nb), frames fastest.
    x3 = x.reshape(G, 1, L).astype(f32)

    # Block-invariant embedding slab (E, L): cb[e, n*T + t] = emb[n % F, e].
    freq = np.arange(nb) % F
    c_rows = emb_table[freq].astype(f32)                      # (nb, E)
    cb = jnp.repeat(c_rows, T, axis=0).T                      # (E, L)

    # Static per-tap validity masks over lane positions.
    t_pos = np.arange(L) % T
    tap_mask = np.stack(
        [((t_pos + (k - 2) >= 0) & (t_pos + (k - 2) < T)) for k in range(5)],
        axis=0).astype(np.float32)                            # (5, L)
    tap_mask = jnp.asarray(tap_mask)

    wb_inputs, wb_specs = [], []

    def add_layer(w, b, cin_h, with_emb):
        # w: (Cout, Cin_total, 5) torch layout (weight_norm already folded).
        w = w.astype(f32)
        b = b.astype(f32)
        cout = w.shape[0]
        w_h = jnp.transpose(w[:, :cin_h, :], (2, 0, 1))       # (5, Cout, Cin_h)
        bias = jnp.broadcast_to(b[:, None], (cout, L))
        if with_emb:
            # Fold the (frame-constant) embedding contribution into the bias.
            w_c = w[:, cin_h:, :]                             # (Cout, E, 5)
            emb_k = jnp.einsum("oek,el->kol", w_c, cb)        # (5, Cout, L)
            bias = bias + jnp.sum(tap_mask[:, None, :] * emb_k, axis=0)
        wb_inputs.extend([w_h, bias])
        wb_specs.append(pl.BlockSpec(w_h.shape, lambda i: (0, 0, 0)))
        wb_specs.append(pl.BlockSpec(bias.shape, lambda i: (0, 0)))

    ich = 1
    for (w, b) in params["convs"]:
        add_layer(w, b, ich, True)
        ich = w.shape[0]
    w_end, b_end = params["end"]
    add_layer(w_end, b_end, w_end.shape[1], False)
    num_conv = len(params["convs"])

    kernel = make_vad_kernel(num_conv, T, L, neg_slope)

    out3 = pl.pallas_call(
        kernel,
        out_shape=jax.ShapeDtypeStruct((G, 1, L), f32),
        grid_spec=pltpu.PrefetchScalarGridSpec(
            num_scalar_prefetch=0,
            grid=(G,),
            in_specs=[pl.BlockSpec((None, 1, L), lambda i: (i, 0, 0))] + wb_specs,
            out_specs=pl.BlockSpec((None, 1, L), lambda i: (i, 0, 0)),
        ),
        compiler_params=pltpu.CompilerParams(
            dimension_semantics=("parallel",)),
    )(x3, *wb_inputs)

    return out3.reshape(B, F, T)


# ----------------------------------------------------------------------------
# Pure-JAX reference (PyTorch semantics, NCW conv) for correctness check
# ----------------------------------------------------------------------------
def ref_forward(x, params, emb_table, neg_slope):
    B, F, T = x.shape
    out = x.reshape(B * F, 1, T)
    c = jnp.tile(emb_table, (B, 1))                           # (B*F, E)
    cb = jnp.broadcast_to(c[:, :, None], (B * F, c.shape[1], T))

    def conv(o, w, b):
        y = lax.conv_general_dilated(
            o, w, window_strides=(1,), padding=[(2, 2)],
            dimension_numbers=("NCH", "OIH", "NCH"))
        return y + b[None, :, None]

    for (w, b) in params["convs"]:
        inp = jnp.concatenate([out, cb], axis=1)
        out = conv(inp, w, b)
        out = jnp.where(out >= 0, out, neg_slope * out)
    w, b = params["end"]
    out = conv(out, w, b)
    return out.reshape(B, F, T)


# ----------------------------------------------------------------------------
# Deterministic parameter init (weight_norm folded: w = g * v / ||v||)
# ----------------------------------------------------------------------------
def init_conv(key, cout, cin, k=5):
    k1, k2, k3 = jax.random.split(key, 3)
    v = jax.random.normal(k1, (cout, cin, k), jnp.float32) * 0.3
    g = jax.random.uniform(k2, (cout,), jnp.float32, minval=0.5, maxval=1.5)
    b = jax.random.normal(k3, (cout,), jnp.float32) * 0.1
    norm = jnp.sqrt(jnp.sum(v * v, axis=(1, 2), keepdims=True))
    w = g[:, None, None] * v / norm
    return w, b


if __name__ == "__main__":
    # Small shapes consistent with the module: in_ch (= n_freq) = 8,
    # mid_ch = emb_ch = 16, num_layers = 4, batch = 2, frames = 16.
    B, F, T = 2, 8, 16
    mid_ch, emb_ch, num_layers, neg_slope = 16, 16, 4, 0.1

    key = jax.random.PRNGKey(0)
    keys = jax.random.split(key, num_layers + 2)

    emb_table = jax.random.normal(keys[0], (F, emb_ch), jnp.float32) * 0.5

    convs = []
    ich = 1
    for i in range(num_layers - 1):
        w, b = init_conv(keys[1 + i], mid_ch, ich + emb_ch)
        convs.append((w, b))
        ich = mid_ch
    end = init_conv(keys[num_layers], 1, mid_ch)
    params = {"convs": convs, "end": end}

    x = jax.random.normal(keys[num_layers + 1], (B, F, T), jnp.float32)

    out = vadnet_pallas(x, params, emb_table, neg_slope=neg_slope)
    out = jax.block_until_ready(out)

    ref = jax.block_until_ready(ref_forward(x, params, emb_table, neg_slope))
    assert out.shape == (B, F, T)
    np.testing.assert_allclose(np.asarray(out), np.asarray(ref),
                               rtol=1e-4, atol=1e-4)
    print("KERNEL_OK")
</pallas_src>

<mosaic_0001>
module attributes {stable_mosaic.version = 11 : i64} {
  func.func @kernel(%arg0: i32, %arg1: memref<1x1x128xf32, #tpu.memory_space<vmem>>, %arg2: memref<5x16x1xf32, #tpu.memory_space<vmem>>, %arg3: memref<16x128xf32, #tpu.memory_space<vmem>>, %arg4: memref<5x16x16xf32, #tpu.memory_space<vmem>>, %arg5: memref<16x128xf32, #tpu.memory_space<vmem>>, %arg6: memref<5x16x16xf32, #tpu.memory_space<vmem>>, %arg7: memref<16x128xf32, #tpu.memory_space<vmem>>, %arg8: memref<5x1x16xf32, #tpu.memory_space<vmem>>, %arg9: memref<1x128xf32, #tpu.memory_space<vmem>>, %arg10: memref<1x1x128xf32, #tpu.memory_space<vmem>>) attributes {dimension_semantics = [#tpu.dimension_semantics<parallel>], iteration_bounds = array<i64: 2>, scalar_prefetch = 0 : i64, scratch_operands = 0 : i64, tpu.core_type = #tpu.core_type<tc>, window_params = [{transform_indices = @transform_0, window_bounds = array<i64: 1, 1, 128>}, {pipeline_mode = #tpu.pipeline_mode<synchronous>, transform_indices = @transform_1, window_bounds = array<i64: 5, 16, 1>}, {pipeline_mode = #tpu.pipeline_mode<synchronous>, transform_indices = @transform_2, window_bounds = array<i64: 16, 128>}, {pipeline_mode = #tpu.pipeline_mode<synchronous>, transform_indices = @transform_3, window_bounds = array<i64: 5, 16, 16>}, {pipeline_mode = #tpu.pipeline_mode<synchronous>, transform_indices = @transform_4, window_bounds = array<i64: 16, 128>}, {pipeline_mode = #tpu.pipeline_mode<synchronous>, transform_indices = @transform_5, window_bounds = array<i64: 5, 16, 16>}, {pipeline_mode = #tpu.pipeline_mode<synchronous>, transform_indices = @transform_6, window_bounds = array<i64: 16, 128>}, {pipeline_mode = #tpu.pipeline_mode<synchronous>, transform_indices = @transform_7, window_bounds = array<i64: 5, 1, 16>}, {pipeline_mode = #tpu.pipeline_mode<synchronous>, transform_indices = @transform_8, window_bounds = array<i64: 1, 128>}, {transform_indices = @transform_9, window_bounds = array<i64: 1, 1, 128>}]} {
    %0 = tpu.iota {dimensions = array<i32: 1>} : vector<1x128xi32>
    %c16_i32 = arith.constant 16 : i32
    %c0_i32 = arith.constant 0 : i32
    %1 = arith.cmpi eq, %c16_i32, %c0_i32 : i32
    %c1_i32 = arith.constant 1 : i32
    %2 = arith.select %1, %c1_i32, %c16_i32 : i32
    %3 = vector.broadcast %2 : i32 to vector<1x128xi32>
    %4 = arith.remsi %0, %3 : vector<1x128xi32>
    %c0_i32_0 = arith.constant 0 : i32
    %5 = vector.broadcast %c0_i32_0 : i32 to vector<1x128xi32>
    %6 = arith.cmpi ne, %4, %5 : vector<1x128xi32>
    %c0_i32_1 = arith.constant 0 : i32
    %7 = vector.broadcast %c0_i32_1 : i32 to vector<1x128xi32>
    %8 = arith.cmpi slt, %4, %7 : vector<1x128xi32>
    %c0_i32_2 = arith.constant 0 : i32
    %9 = arith.cmpi slt, %2, %c0_i32_2 : i32
    %10 = vector.broadcast %9 : i1 to vector<1x128xi1>
    %11 = vector.broadcast %10 : vector<1x128xi1> to vector<1x128xi1>
    %12 = arith.xori %8, %11 : vector<1x128xi1>
    %13 = arith.andi %12, %6 : vector<1x128xi1>
    %14 = vector.broadcast %2 : i32 to vector<1x128xi32>
    %15 = arith.addi %4, %14 : vector<1x128xi32>
    %16 = arith.select %13, %15, %4 : vector<1x128xi1>, vector<1x128xi32>
    %c-2_i32 = arith.constant -2 : i32
    %17 = vector.broadcast %c-2_i32 : i32 to vector<1x128xi32>
    %18 = arith.addi %16, %17 : vector<1x128xi32>
    %c0_i32_3 = arith.constant 0 : i32
    %19 = vector.broadcast %c0_i32_3 : i32 to vector<1x128xi32>
    %20 = arith.cmpi sge, %18, %19 : vector<1x128xi32>
    %c-2_i32_4 = arith.constant -2 : i32
    %21 = vector.broadcast %c-2_i32_4 : i32 to vector<1x128xi32>
    %22 = arith.addi %16, %21 : vector<1x128xi32>
    %c16_i32_5 = arith.constant 16 : i32
    %23 = vector.broadcast %c16_i32_5 : i32 to vector<1x128xi32>
    %24 = arith.cmpi slt, %22, %23 : vector<1x128xi32>
    %25 = arith.andi %20, %24 : vector<1x128xi1>
    %c-1_i32 = arith.constant -1 : i32
    %26 = vector.broadcast %c-1_i32 : i32 to vector<1x128xi32>
    %27 = arith.addi %16, %26 : vector<1x128xi32>
    %c0_i32_6 = arith.constant 0 : i32
    %28 = vector.broadcast %c0_i32_6 : i32 to vector<1x128xi32>
    %29 = arith.cmpi sge, %27, %28 : vector<1x128xi32>
    %c-1_i32_7 = arith.constant -1 : i32
    %30 = vector.broadcast %c-1_i32_7 : i32 to vector<1x128xi32>
    %31 = arith.addi %16, %30 : vector<1x128xi32>
    %c16_i32_8 = arith.constant 16 : i32
    %32 = vector.broadcast %c16_i32_8 : i32 to vector<1x128xi32>
    %33 = arith.cmpi slt, %31, %32 : vector<1x128xi32>
    %34 = arith.andi %29, %33 : vector<1x128xi1>
    %c1_i32_9 = arith.constant 1 : i32
    %35 = vector.broadcast %c1_i32_9 : i32 to vector<1x128xi32>
    %36 = arith.addi %16, %35 : vector<1x128xi32>
    %c0_i32_10 = arith.constant 0 : i32
    %37 = vector.broadcast %c0_i32_10 : i32 to vector<1x128xi32>
    %38 = arith.cmpi sge, %36, %37 : vector<1x128xi32>
    %c1_i32_11 = arith.constant 1 : i32
    %39 = vector.broadcast %c1_i32_11 : i32 to vector<1x128xi32>
    %40 = arith.addi %16, %39 : vector<1x128xi32>
    %c16_i32_12 = arith.constant 16 : i32
    %41 = vector.broadcast %c16_i32_12 : i32 to vector<1x128xi32>
    %42 = arith.cmpi slt, %40, %41 : vector<1x128xi32>
    %43 = arith.andi %38, %42 : vector<1x128xi1>
    %c2_i32 = arith.constant 2 : i32
    %44 = vector.broadcast %c2_i32 : i32 to vector<1x128xi32>
    %45 = arith.addi %16, %44 : vector<1x128xi32>
    %c0_i32_13 = arith.constant 0 : i32
    %46 = vector.broadcast %c0_i32_13 : i32 to vector<1x128xi32>
    %47 = arith.cmpi sge, %45, %46 : vector<1x128xi32>
    %c2_i32_14 = arith.constant 2 : i32
    %48 = vector.broadcast %c2_i32_14 : i32 to vector<1x128xi32>
    %49 = arith.addi %16, %48 : vector<1x128xi32>
    %c16_i32_15 = arith.constant 16 : i32
    %50 = vector.broadcast %c16_i32_15 : i32 to vector<1x128xi32>
    %51 = arith.cmpi slt, %49, %50 : vector<1x128xi32>
    %52 = arith.andi %47, %51 : vector<1x128xi1>
    %c0 = arith.constant 0 : index
    %c0_16 = arith.constant 0 : index
    %c0_17 = arith.constant 0 : index
    %53 = vector.load %arg1[%c0, %c0_16, %c0_17] : memref<1x1x128xf32, #tpu.memory_space<vmem>>, vector<1x1x128xf32>
    %54 = vector.shape_cast %53 : vector<1x1x128xf32> to vector<1x128xf32>
    %c0_18 = arith.constant 0 : index
    %c0_19 = arith.constant 0 : index
    %55 = vector.load %arg3[%c0_18, %c0_19] : memref<16x128xf32, #tpu.memory_space<vmem>>, vector<16x128xf32>
    %c2_i32_20 = arith.constant 2 : i32
    %56 = tpu.dynamic_rotate %54 by %c2_i32_20 dim 1 : vector<1x128xf32>, i32 -> vector<1x128xf32>
    %cst = arith.constant 0.000000e+00 : f32
    %57 = vector.broadcast %cst : f32 to vector<1x128xf32>
    %58 = arith.select %25, %56, %57 : vector<1x128xi1>, vector<1x128xf32>
    %c0_21 = arith.constant 0 : index
    %c0_22 = arith.constant 0 : index
    %c0_23 = arith.constant 0 : index
    %59 = vector.load %arg2[%c0_21, %c0_22, %c0_23] : memref<5x16x1xf32, #tpu.memory_space<vmem>>, vector<1x16x1xf32>
    %60 = vector.shape_cast %59 : vector<1x16x1xf32> to vector<16x1xf32>
    %61 = vector.broadcast %60 : vector<16x1xf32> to vector<16x128xf32>
    %62 = vector.broadcast %58 : vector<1x128xf32> to vector<16x128xf32>
    %63 = arith.mulf %61, %62 : vector<16x128xf32>
    %64 = arith.addf %55, %63 : vector<16x128xf32>
    %c1_i32_24 = arith.constant 1 : i32
    %65 = tpu.dynamic_rotate %54 by %c1_i32_24 dim 1 : vector<1x128xf32>, i32 -> vector<1x128xf32>
    %cst_25 = arith.constant 0.000000e+00 : f32
    %66 = vector.broadcast %cst_25 : f32 to vector<1x128xf32>
    %67 = arith.select %34, %65, %66 : vector<1x128xi1>, vector<1x128xf32>
    %c1 = arith.constant 1 : index
    %c0_26 = arith.constant 0 : index
    %c0_27 = arith.constant 0 : index
    %68 = vector.load %arg2[%c1, %c0_26, %c0_27] : memref<5x16x1xf32, #tpu.memory_space<vmem>>, vector<1x16x1xf32>
    %69 = vector.shape_cast %68 : vector<1x16x1xf32> to vector<16x1xf32>
    %70 = vector.broadcast %69 : vector<16x1xf32> to vector<16x128xf32>
    %71 = vector.broadcast %67 : vector<1x128xf32> to vector<16x128xf32>
    %72 = arith.mulf %70, %71 : vector<16x128xf32>
    %73 = arith.addf %64, %72 : vector<16x128xf32>
    %c2 = arith.constant 2 : index
    %c0_28 = arith.constant 0 : index
    %c0_29 = arith.constant 0 : index
    %74 = vector.load %arg2[%c2, %c0_28, %c0_29] : memref<5x16x1xf32, #tpu.memory_space<vmem>>, vector<1x16x1xf32>
    %75 = vector.shape_cast %74 : vector<1x16x1xf32> to vector<16x1xf32>
    %76 = vector.broadcast %75 : vector<16x1xf32> to vector<16x128xf32>
    %77 = vector.broadcast %54 : vector<1x128xf32> to vector<16x128xf32>
    %78 = arith.mulf %76, %77 : vector<16x128xf32>
    %79 = arith.addf %73, %78 : vector<16x128xf32>
    %c127_i32 = arith.constant 127 : i32
    %80 = tpu.dynamic_rotate %54 by %c127_i32 dim 1 : vector<1x128xf32>, i32 -> vector<1x128xf32>
    %cst_30 = arith.constant 0.000000e+00 : f32
    %81 = vector.broadcast %cst_30 : f32 to vector<1x128xf32>
    %82 = arith.select %43, %80, %81 : vector<1x128xi1>, vector<1x128xf32>
    %c3 = arith.constant 3 : index
    %c0_31 = arith.constant 0 : index
    %c0_32 = arith.constant 0 : index
    %83 = vector.load %arg2[%c3, %c0_31, %c0_32] : memref<5x16x1xf32, #tpu.memory_space<vmem>>, vector<1x16x1xf32>
    %84 = vector.shape_cast %83 : vector<1x16x1xf32> to vector<16x1xf32>
    %85 = vector.broadcast %84 : vector<16x1xf32> to vector<16x128xf32>
    %86 = vector.broadcast %82 : vector<1x128xf32> to vector<16x128xf32>
    %87 = arith.mulf %85, %86 : vector<16x128xf32>
    %88 = arith.addf %79, %87 : vector<16x128xf32>
    %c126_i32 = arith.constant 126 : i32
    %89 = tpu.dynamic_rotate %54 by %c126_i32 dim 1 : vector<1x128xf32>, i32 -> vector<1x128xf32>
    %cst_33 = arith.constant 0.000000e+00 : f32
    %90 = vector.broadcast %cst_33 : f32 to vector<1x128xf32>
    %91 = arith.select %52, %89, %90 : vector<1x128xi1>, vector<1x128xf32>
    %c4 = arith.constant 4 : index
    %c0_34 = arith.constant 0 : index
    %c0_35 = arith.constant 0 : index
    %92 = vector.load %arg2[%c4, %c0_34, %c0_35] : memref<5x16x1xf32, #tpu.memory_space<vmem>>, vector<1x16x1xf32>
    %93 = vector.shape_cast %92 : vector<1x16x1xf32> to vector<16x1xf32>
    %94 = vector.broadcast %93 : vector<16x1xf32> to vector<16x128xf32>
    %95 = vector.broadcast %91 : vector<1x128xf32> to vector<16x128xf32>
    %96 = arith.mulf %94, %95 : vector<16x128xf32>
    %97 = arith.addf %88, %96 : vector<16x128xf32>
    %cst_36 = arith.constant 0.000000e+00 : f32
    %98 = vector.broadcast %cst_36 : f32 to vector<16x128xf32>
    %99 = arith.cmpf oge, %97, %98 : vector<16x128xf32>
    %cst_37 = arith.constant 1.000000e-01 : f32
    %100 = vector.broadcast %cst_37 : f32 to vector<16x128xf32>
    %101 = arith.mulf %100, %97 : vector<16x128xf32>
    %102 = arith.select %99, %97, %101 : vector<16x128xi1>, vector<16x128xf32>
    %c0_38 = arith.constant 0 : index
    %c0_39 = arith.constant 0 : index
    %103 = vector.load %arg5[%c0_38, %c0_39] : memref<16x128xf32, #tpu.memory_space<vmem>>, vector<16x128xf32>
    %c2_i32_40 = arith.constant 2 : i32
    %104 = tpu.dynamic_rotate %102 by %c2_i32_40 dim 1 : vector<16x128xf32>, i32 -> vector<16x128xf32>
    %cst_41 = arith.constant 0.000000e+00 : f32
    %105 = vector.shape_cast %25 : vector<1x128xi1> to vector<1x128xi1>
    %106 = vector.broadcast %105 : vector<1x128xi1> to vector<16x128xi1>
    %107 = vector.broadcast %cst_41 : f32 to vector<16x128xf32>
    %108 = arith.select %106, %104, %107 : vector<16x128xi1>, vector<16x128xf32>
    %c0_42 = arith.constant 0 : index
    %c0_43 = arith.constant 0 : index
    %c0_44 = arith.constant 0 : index
    %109 = vector.load %arg4[%c0_42, %c0_43, %c0_44] : memref<5x16x16xf32, #tpu.memory_space<vmem>>, vector<1x16x16xf32>
    %110 = vector.shape_cast %109 : vector<1x16x16xf32> to vector<16x16xf32>
    %cst_45 = arith.constant dense<0.000000e+00> : vector<16x128xf32>
    %111 = tpu.matmul %110, %108, %cst_45 {dimension_numbers = #tpu.dot_dimension_numbers<[1], [0], [0], [1], [0, 0, 1, 1], [], []>} : vector<16x16xf32>, vector<16x128xf32>, vector<16x128xf32> -> vector<16x128xf32>
    %112 = arith.addf %103, %111 : vector<16x128xf32>
    %c1_i32_46 = arith.constant 1 : i32
    %113 = tpu.dynamic_rotate %102 by %c1_i32_46 dim 1 : vector<16x128xf32>, i32 -> vector<16x128xf32>
    %cst_47 = arith.constant 0.000000e+00 : f32
    %114 = vector.shape_cast %34 : vector<1x128xi1> to vector<1x128xi1>
    %115 = vector.broadcast %114 : vector<1x128xi1> to vector<16x128xi1>
    %116 = vector.broadcast %cst_47 : f32 to vector<16x128xf32>
    %117 = arith.select %115, %113, %116 : vector<16x128xi1>, vector<16x128xf32>
    %c1_48 = arith.constant 1 : index
    %c0_49 = arith.constant 0 : index
    %c0_50 = arith.constant 0 : index
    %118 = vector.load %arg4[%c1_48, %c0_49, %c0_50] : memref<5x16x16xf32, #tpu.memory_space<vmem>>, vector<1x16x16xf32>
    %119 = vector.shape_cast %118 : vector<1x16x16xf32> to vector<16x16xf32>
    %cst_51 = arith.constant dense<0.000000e+00> : vector<16x128xf32>
    %120 = tpu.matmul %119, %117, %cst_51 {dimension_numbers = #tpu.dot_dimension_numbers<[1], [0], [0], [1], [0, 0, 1, 1], [], []>} : vector<16x16xf32>, vector<16x128xf32>, vector<16x128xf32> -> vector<16x128xf32>
    %121 = arith.addf %112, %120 : vector<16x128xf32>
    %c2_52 = arith.constant 2 : index
    %c0_53 = arith.constant 0 : index
    %c0_54 = arith.constant 0 : index
    %122 = vector.load %arg4[%c2_52, %c0_53, %c0_54] : memref<5x16x16xf32, #tpu.memory_space<vmem>>, vector<1x16x16xf32>
    %123 = vector.shape_cast %122 : vector<1x16x16xf32> to vector<16x16xf32>
    %cst_55 = arith.constant dense<0.000000e+00> : vector<16x128xf32>
    %124 = tpu.matmul %123, %102, %cst_55 {dimension_numbers = #tpu.dot_dimension_numbers<[1], [0], [0], [1], [0, 0, 1, 1], [], []>} : vector<16x16xf32>, vector<16x128xf32>, vector<16x128xf32> -> vector<16x128xf32>
    %125 = arith.addf %121, %124 : vector<16x128xf32>
    %c127_i32_56 = arith.constant 127 : i32
    %126 = tpu.dynamic_rotate %102 by %c127_i32_56 dim 1 : vector<16x128xf32>, i32 -> vector<16x128xf32>
    %cst_57 = arith.constant 0.000000e+00 : f32
    %127 = vector.shape_cast %43 : vector<1x128xi1> to vector<1x128xi1>
    %128 = vector.broadcast %127 : vector<1x128xi1> to vector<16x128xi1>
    %129 = vector.broadcast %cst_57 : f32 to vector<16x128xf32>
    %130 = arith.select %128, %126, %129 : vector<16x128xi1>, vector<16x128xf32>
    %c3_58 = arith.constant 3 : index
    %c0_59 = arith.constant 0 : index
    %c0_60 = arith.constant 0 : index
    %131 = vector.load %arg4[%c3_58, %c0_59, %c0_60] : memref<5x16x16xf32, #tpu.memory_space<vmem>>, vector<1x16x16xf32>
    %132 = vector.shape_cast %131 : vector<1x16x16xf32> to vector<16x16xf32>
    %cst_61 = arith.constant dense<0.000000e+00> : vector<16x128xf32>
    %133 = tpu.matmul %132, %130, %cst_61 {dimension_numbers = #tpu.dot_dimension_numbers<[1], [0], [0], [1], [0, 0, 1, 1], [], []>} : vector<16x16xf32>, vector<16x128xf32>, vector<16x128xf32> -> vector<16x128xf32>
    %134 = arith.addf %125, %133 : vector<16x128xf32>
    %c126_i32_62 = arith.constant 126 : i32
    %135 = tpu.dynamic_rotate %102 by %c126_i32_62 dim 1 : vector<16x128xf32>, i32 -> vector<16x128xf32>
    %cst_63 = arith.constant 0.000000e+00 : f32
    %136 = vector.shape_cast %52 : vector<1x128xi1> to vector<1x128xi1>
    %137 = vector.broadcast %136 : vector<1x128xi1> to vector<16x128xi1>
    %138 = vector.broadcast %cst_63 : f32 to vector<16x128xf32>
    %139 = arith.select %137, %135, %138 : vector<16x128xi1>, vector<16x128xf32>
    %c4_64 = arith.constant 4 : index
    %c0_65 = arith.constant 0 : index
    %c0_66 = arith.constant 0 : index
    %140 = vector.load %arg4[%c4_64, %c0_65, %c0_66] : memref<5x16x16xf32, #tpu.memory_space<vmem>>, vector<1x16x16xf32>
    %141 = vector.shape_cast %140 : vector<1x16x16xf32> to vector<16x16xf32>
    %cst_67 = arith.constant dense<0.000000e+00> : vector<16x128xf32>
    %142 = tpu.matmul %141, %139, %cst_67 {dimension_numbers = #tpu.dot_dimension_numbers<[1], [0], [0], [1], [0, 0, 1, 1], [], []>} : vector<16x16xf32>, vector<16x128xf32>, vector<16x128xf32> -> vector<16x128xf32>
    %143 = arith.addf %134, %142 : vector<16x128xf32>
    %cst_68 = arith.constant 0.000000e+00 : f32
    %144 = vector.broadcast %cst_68 : f32 to vector<16x128xf32>
    %145 = arith.cmpf oge, %143, %144 : vector<16x128xf32>
    %cst_69 = arith.constant 1.000000e-01 : f32
    %146 = vector.broadcast %cst_69 : f32 to vector<16x128xf32>
    %147 = arith.mulf %146, %143 : vector<16x128xf32>
    %148 = arith.select %145, %143, %147 : vector<16x128xi1>, vector<16x128xf32>
    %c0_70 = arith.constant 0 : index
    %c0_71 = arith.constant 0 : index
    %149 = vector.load %arg7[%c0_70, %c0_71] : memref<16x128xf32, #tpu.memory_space<vmem>>, vector<16x128xf32>
    %c2_i32_72 = arith.constant 2 : i32
    %150 = tpu.dynamic_rotate %148 by %c2_i32_72 dim 1 : vector<16x128xf32>, i32 -> vector<16x128xf32>
    %cst_73 = arith.constant 0.000000e+00 : f32
    %151 = vector.shape_cast %25 : vector<1x128xi1> to vector<1x128xi1>
    %152 = vector.broadcast %151 : vector<1x128xi1> to vector<16x128xi1>
    %153 = vector.broadcast %cst_73 : f32 to vector<16x128xf32>
    %154 = arith.select %152, %150, %153 : vector<16x128xi1>, vector<16x128xf32>
    %c0_74 = arith.constant 0 : index
    %c0_75 = arith.constant 0 : index
    %c0_76 = arith.constant 0 : index
    %155 = vector.load %arg6[%c0_74, %c0_75, %c0_76] : memref<5x16x16xf32, #tpu.memory_space<vmem>>, vector<1x16x16xf32>
    %156 = vector.shape_cast %155 : vector<1x16x16xf32> to vector<16x16xf32>
    %cst_77 = arith.constant dense<0.000000e+00> : vector<16x128xf32>
    %157 = tpu.matmul %156, %154, %cst_77 {dimension_numbers = #tpu.dot_dimension_numbers<[1], [0], [0], [1], [0, 0, 1, 1], [], []>} : vector<16x16xf32>, vector<16x128xf32>, vector<16x128xf32> -> vector<16x128xf32>
    %158 = arith.addf %149, %157 : vector<16x128xf32>
    %c1_i32_78 = arith.constant 1 : i32
    %159 = tpu.dynamic_rotate %148 by %c1_i32_78 dim 1 : vector<16x128xf32>, i32 -> vector<16x128xf32>
    %cst_79 = arith.constant 0.000000e+00 : f32
    %160 = vector.shape_cast %34 : vector<1x128xi1> to vector<1x128xi1>
    %161 = vector.broadcast %160 : vector<1x128xi1> to vector<16x128xi1>
    %162 = vector.broadcast %cst_79 : f32 to vector<16x128xf32>
    %163 = arith.select %161, %159, %162 : vector<16x128xi1>, vector<16x128xf32>
    %c1_80 = arith.constant 1 : index
    %c0_81 = arith.constant 0 : index
    %c0_82 = arith.constant 0 : index
    %164 = vector.load %arg6[%c1_80, %c0_81, %c0_82] : memref<5x16x16xf32, #tpu.memory_space<vmem>>, vector<1x16x16xf32>
    %165 = vector.shape_cast %164 : vector<1x16x16xf32> to vector<16x16xf32>
    %cst_83 = arith.constant dense<0.000000e+00> : vector<16x128xf32>
    %166 = tpu.matmul %165, %163, %cst_83 {dimension_numbers = #tpu.dot_dimension_numbers<[1], [0], [0], [1], [0, 0, 1, 1], [], []>} : vector<16x16xf32>, vector<16x128xf32>, vector<16x128xf32> -> vector<16x128xf32>
    %167 = arith.addf %158, %166 : vector<16x128xf32>
    %c2_84 = arith.constant 2 : index
    %c0_85 = arith.constant 0 : index
    %c0_86 = arith.constant 0 : index
    %168 = vector.load %arg6[%c2_84, %c0_85, %c0_86] : memref<5x16x16xf32, #tpu.memory_space<vmem>>, vector<1x16x16xf32>
    %169 = vector.shape_cast %168 : vector<1x16x16xf32> to vector<16x16xf32>
    %cst_87 = arith.constant dense<0.000000e+00> : vector<16x128xf32>
    %170 = tpu.matmul %169, %148, %cst_87 {dimension_numbers = #tpu.dot_dimension_numbers<[1], [0], [0], [1], [0, 0, 1, 1], [], []>} : vector<16x16xf32>, vector<16x128xf32>, vector<16x128xf32> -> vector<16x128xf32>
    %171 = arith.addf %167, %170 : vector<16x128xf32>
    %c127_i32_88 = arith.constant 127 : i32
    %172 = tpu.dynamic_rotate %148 by %c127_i32_88 dim 1 : vector<16x128xf32>, i32 -> vector<16x128xf32>
    %cst_89 = arith.constant 0.000000e+00 : f32
    %173 = vector.shape_cast %43 : vector<1x128xi1> to vector<1x128xi1>
    %174 = vector.broadcast %173 : vector<1x128xi1> to vector<16x128xi1>
    %175 = vector.broadcast %cst_89 : f32 to vector<16x128xf32>
    %176 = arith.select %174, %172, %175 : vector<16x128xi1>, vector<16x128xf32>
    %c3_90 = arith.constant 3 : index
    %c0_91 = arith.constant 0 : index
    %c0_92 = arith.constant 0 : index
    %177 = vector.load %arg6[%c3_90, %c0_91, %c0_92] : memref<5x16x16xf32, #tpu.memory_space<vmem>>, vector<1x16x16xf32>
    %178 = vector.shape_cast %177 : vector<1x16x16xf32> to vector<16x16xf32>
    %cst_93 = arith.constant dense<0.000000e+00> : vector<16x128xf32>
    %179 = tpu.matmul %178, %176, %cst_93 {dimension_numbers = #tpu.dot_dimension_numbers<[1], [0], [0], [1], [0, 0, 1, 1], [], []>} : vector<16x16xf32>, vector<16x128xf32>, vector<16x128xf32> -> vector<16x128xf32>
    %180 = arith.addf %171, %179 : vector<16x128xf32>
    %c126_i32_94 = arith.constant 126 : i32
    %181 = tpu.dynamic_rotate %148 by %c126_i32_94 dim 1 : vector<16x128xf32>, i32 -> vector<16x128xf32>
    %cst_95 = arith.constant 0.000000e+00 : f32
    %182 = vector.shape_cast %52 : vector<1x128xi1> to vector<1x128xi1>
    %183 = vector.broadcast %182 : vector<1x128xi1> to vector<16x128xi1>
    %184 = vector.broadcast %cst_95 : f32 to vector<16x128xf32>
    %185 = arith.select %183, %181, %184 : vector<16x128xi1>, vector<16x128xf32>
    %c4_96 = arith.constant 4 : index
    %c0_97 = arith.constant 0 : index
    %c0_98 = arith.constant 0 : index
    %186 = vector.load %arg6[%c4_96, %c0_97, %c0_98] : memref<5x16x16xf32, #tpu.memory_space<vmem>>, vector<1x16x16xf32>
    %187 = vector.shape_cast %186 : vector<1x16x16xf32> to vector<16x16xf32>
    %cst_99 = arith.constant dense<0.000000e+00> : vector<16x128xf32>
    %188 = tpu.matmul %187, %185, %cst_99 {dimension_numbers = #tpu.dot_dimension_numbers<[1], [0], [0], [1], [0, 0, 1, 1], [], []>} : vector<16x16xf32>, vector<16x128xf32>, vector<16x128xf32> -> vector<16x128xf32>
    %189 = arith.addf %180, %188 : vector<16x128xf32>
    %cst_100 = arith.constant 0.000000e+00 : f32
    %190 = vector.broadcast %cst_100 : f32 to vector<16x128xf32>
    %191 = arith.cmpf oge, %189, %190 : vector<16x128xf32>
    %cst_101 = arith.constant 1.000000e-01 : f32
    %192 = vector.broadcast %cst_101 : f32 to vector<16x128xf32>
    %193 = arith.mulf %192, %189 : vector<16x128xf32>
    %194 = arith.select %191, %189, %193 : vector<16x128xi1>, vector<16x128xf32>
    %c0_102 = arith.constant 0 : index
    %c0_103 = arith.constant 0 : index
    %195 = vector.load %arg9[%c0_102, %c0_103] : memref<1x128xf32, #tpu.memory_space<vmem>>, vector<1x128xf32>
    %c2_i32_104 = arith.constant 2 : i32
    %196 = tpu.dynamic_rotate %194 by %c2_i32_104 dim 1 : vector<16x128xf32>, i32 -> vector<16x128xf32>
    %cst_105 = arith.constant 0.000000e+00 : f32
    %197 = vector.shape_cast %25 : vector<1x128xi1> to vector<1x128xi1>
    %198 = vector.broadcast %197 : vector<1x128xi1> to vector<16x128xi1>
    %199 = vector.broadcast %cst_105 : f32 to vector<16x128xf32>
    %200 = arith.select %198, %196, %199 : vector<16x128xi1>, vector<16x128xf32>
    %c0_106 = arith.constant 0 : index
    %c0_107 = arith.constant 0 : index
    %c0_108 = arith.constant 0 : index
    %201 = vector.load %arg8[%c0_106, %c0_107, %c0_108] : memref<5x1x16xf32, #tpu.memory_space<vmem>>, vector<1x1x16xf32>
    %202 = vector.shape_cast %201 : vector<1x1x16xf32> to vector<1x16xf32>
    %cst_109 = arith.constant dense<0.000000e+00> : vector<1x128xf32>
    %203 = tpu.matmul %202, %200, %cst_109 {dimension_numbers = #tpu.dot_dimension_numbers<[1], [0], [0], [1], [0, 0, 1, 1], [], []>} : vector<1x16xf32>, vector<16x128xf32>, vector<1x128xf32> -> vector<1x128xf32>
    %204 = arith.addf %195, %203 : vector<1x128xf32>
    %c1_i32_110 = arith.constant 1 : i32
    %205 = tpu.dynamic_rotate %194 by %c1_i32_110 dim 1 : vector<16x128xf32>, i32 -> vector<16x128xf32>
    %cst_111 = arith.constant 0.000000e+00 : f32
    %206 = vector.shape_cast %34 : vector<1x128xi1> to vector<1x128xi1>
    %207 = vector.broadcast %206 : vector<1x128xi1> to vector<16x128xi1>
    %208 = vector.broadcast %cst_111 : f32 to vector<16x128xf32>
    %209 = arith.select %207, %205, %208 : vector<16x128xi1>, vector<16x128xf32>
    %c1_112 = arith.constant 1 : index
    %c0_113 = arith.constant 0 : index
    %c0_114 = arith.constant 0 : index
    %210 = vector.load %arg8[%c1_112, %c0_113, %c0_114] : memref<5x1x16xf32, #tpu.memory_space<vmem>>, vector<1x1x16xf32>
    %211 = vector.shape_cast %210 : vector<1x1x16xf32> to vector<1x16xf32>
    %cst_115 = arith.constant dense<0.000000e+00> : vector<1x128xf32>
    %212 = tpu.matmul %211, %209, %cst_115 {dimension_numbers = #tpu.dot_dimension_numbers<[1], [0], [0], [1], [0, 0, 1, 1], [], []>} : vector<1x16xf32>, vector<16x128xf32>, vector<1x128xf32> -> vector<1x128xf32>
    %213 = arith.addf %204, %212 : vector<1x128xf32>
    %c2_116 = arith.constant 2 : index
    %c0_117 = arith.constant 0 : index
    %c0_118 = arith.constant 0 : index
    %214 = vector.load %arg8[%c2_116, %c0_117, %c0_118] : memref<5x1x16xf32, #tpu.memory_space<vmem>>, vector<1x1x16xf32>
    %215 = vector.shape_cast %214 : vector<1x1x16xf32> to vector<1x16xf32>
    %cst_119 = arith.constant dense<0.000000e+00> : vector<1x128xf32>
    %216 = tpu.matmul %215, %194, %cst_119 {dimension_numbers = #tpu.dot_dimension_numbers<[1], [0], [0], [1], [0, 0, 1, 1], [], []>} : vector<1x16xf32>, vector<16x128xf32>, vector<1x128xf32> -> vector<1x128xf32>
    %217 = arith.addf %213, %216 : vector<1x128xf32>
    %c127_i32_120 = arith.constant 127 : i32
    %218 = tpu.dynamic_rotate %194 by %c127_i32_120 dim 1 : vector<16x128xf32>, i32 -> vector<16x128xf32>
    %cst_121 = arith.constant 0.000000e+00 : f32
    %219 = vector.shape_cast %43 : vector<1x128xi1> to vector<1x128xi1>
    %220 = vector.broadcast %219 : vector<1x128xi1> to vector<16x128xi1>
    %221 = vector.broadcast %cst_121 : f32 to vector<16x128xf32>
    %222 = arith.select %220, %218, %221 : vector<16x128xi1>, vector<16x128xf32>
    %c3_122 = arith.constant 3 : index
    %c0_123 = arith.constant 0 : index
    %c0_124 = arith.constant 0 : index
    %223 = vector.load %arg8[%c3_122, %c0_123, %c0_124] : memref<5x1x16xf32, #tpu.memory_space<vmem>>, vector<1x1x16xf32>
    %224 = vector.shape_cast %223 : vector<1x1x16xf32> to vector<1x16xf32>
    %cst_125 = arith.constant dense<0.000000e+00> : vector<1x128xf32>
    %225 = tpu.matmul %224, %222, %cst_125 {dimension_numbers = #tpu.dot_dimension_numbers<[1], [0], [0], [1], [0, 0, 1, 1], [], []>} : vector<1x16xf32>, vector<16x128xf32>, vector<1x128xf32> -> vector<1x128xf32>
    %226 = arith.addf %217, %225 : vector<1x128xf32>
    %c126_i32_126 = arith.constant 126 : i32
    %227 = tpu.dynamic_rotate %194 by %c126_i32_126 dim 1 : vector<16x128xf32>, i32 -> vector<16x128xf32>
    %cst_127 = arith.constant 0.000000e+00 : f32
    %228 = vector.shape_cast %52 : vector<1x128xi1> to vector<1x128xi1>
    %229 = vector.broadcast %228 : vector<1x128xi1> to vector<16x128xi1>
    %230 = vector.broadcast %cst_127 : f32 to vector<16x128xf32>
    %231 = arith.select %229, %227, %230 : vector<16x128xi1>, vector<16x128xf32>
    %c4_128 = arith.constant 4 : index
    %c0_129 = arith.constant 0 : index
    %c0_130 = arith.constant 0 : index
    %232 = vector.load %arg8[%c4_128, %c0_129, %c0_130] : memref<5x1x16xf32, #tpu.memory_space<vmem>>, vector<1x1x16xf32>
    %233 = vector.shape_cast %232 : vector<1x1x16xf32> to vector<1x16xf32>
    %cst_131 = arith.constant dense<0.000000e+00> : vector<1x128xf32>
    %234 = tpu.matmul %233, %231, %cst_131 {dimension_numbers = #tpu.dot_dimension_numbers<[1], [0], [0], [1], [0, 0, 1, 1], [], []>} : vector<1x16xf32>, vector<16x128xf32>, vector<1x128xf32> -> vector<1x128xf32>
    %235 = arith.addf %226, %234 : vector<1x128xf32>
    %c0_132 = arith.constant 0 : index
    %c0_133 = arith.constant 0 : index
    %c0_134 = arith.constant 0 : index
    %236 = vector.load %arg10[%c0_132, %c0_133, %c0_134] : memref<1x1x128xf32, #tpu.memory_space<vmem>>, vector<1x1x128xf32>
    %237 = vector.shape_cast %236 : vector<1x1x128xf32> to vector<1x128xf32>
    %238 = vector.shape_cast %235 : vector<1x128xf32> to vector<1x1x128xf32>
    tpu.vector_store %arg10[%c0_132, %c0_133, %c0_134], %238 {strides = array<i32>} : memref<1x1x128xf32, #tpu.memory_space<vmem>>, vector<1x1x128xf32>,
    return
  }
  func.func @transform_0(%arg0: i32) -> (i32, i32, i32) {
    %c0_i32 = arith.constant 0 : i32
    %c0_i32_0 = arith.constant 0 : i32
    %c0_i32_1 = arith.constant 0 : i32
    return %arg0, %c0_i32, %c0_i32_0 : i32, i32, i32
  }
  func.func @transform_1(%arg0: i32) -> (i32, i32, i32) {
    %c0_i32 = arith.constant 0 : i32
    %c0_i32_0 = arith.constant 0 : i32
    %c0_i32_1 = arith.constant 0 : i32
    %c0_i32_2 = arith.constant 0 : i32
    return %c0_i32, %c0_i32_0, %c0_i32_1 : i32, i32, i32
  }
  func.func @transform_2(%arg0: i32) -> (i32, i32) {
    %c0_i32 = arith.constant 0 : i32
    %c0_i32_0 = arith.constant 0 : i32
    %c0_i32_1 = arith.constant 0 : i32
    return %c0_i32, %c0_i32_0 : i32, i32
  }
  func.func @transform_3(%arg0: i32) -> (i32, i32, i32) {
    %c0_i32 = arith.constant 0 : i32
    %c0_i32_0 = arith.constant 0 : i32
    %c0_i32_1 = arith.constant 0 : i32
    %c0_i32_2 = arith.constant 0 : i32
    return %c0_i32, %c0_i32_0, %c0_i32_1 : i32, i32, i32
  }
  func.func @transform_4(%arg0: i32) -> (i32, i32) {
    %c0_i32 = arith.constant 0 : i32
    %c0_i32_0 = arith.constant 0 : i32
    %c0_i32_1 = arith.constant 0 : i32
    return %c0_i32, %c0_i32_0 : i32, i32
  }
  func.func @transform_5(%arg0: i32) -> (i32, i32, i32) {
    %c0_i32 = arith.constant 0 : i32
    %c0_i32_0 = arith.constant 0 : i32
    %c0_i32_1 = arith.constant 0 : i32
    %c0_i32_2 = arith.constant 0 : i32
    return %c0_i32, %c0_i32_0, %c0_i32_1 : i32, i32, i32
  }
  func.func @transform_6(%arg0: i32) -> (i32, i32) {
    %c0_i32 = arith.constant 0 : i32
    %c0_i32_0 = arith.constant 0 : i32
    %c0_i32_1 = arith.constant 0 : i32
    return %c0_i32, %c0_i32_0 : i32, i32
  }
  func.func @transform_7(%arg0: i32) -> (i32, i32, i32) {
    %c0_i32 = arith.constant 0 : i32
    %c0_i32_0 = arith.constant 0 : i32
    %c0_i32_1 = arith.constant 0 : i32
    %c0_i32_2 = arith.constant 0 : i32
    return %c0_i32, %c0_i32_0, %c0_i32_1 : i32, i32, i32
  }
  func.func @transform_8(%arg0: i32) -> (i32, i32) {
    %c0_i32 = arith.constant 0 : i32
    %c0_i32_0 = arith.constant 0 : i32
    %c0_i32_1 = arith.constant 0 : i32
    return %c0_i32, %c0_i32_0 : i32, i32
  }
  func.func @transform_9(%arg0: i32) -> (i32, i32, i32) {
    %c0_i32 = arith.constant 0 : i32
    %c0_i32_0 = arith.constant 0 : i32
    %c0_i32_1 = arith.constant 0 : i32
    return %arg0, %c0_i32, %c0_i32_0 : i32, i32, i32
  }
}

</mosaic_0001>

<llo_original>
// kernel: tpu_custom_call.1
$region0: #{tpu_custom_call.1}
  #allocation0 [shape = 'u32[]', space=smem, size = 0x4, offset = 0x4, fixed_abs, tag = 'smem constant byte address 0x4 - core index']
  #allocation1 [shape = 'u32[144,128]{1,0:T(1,128)}', space=vmem, size = 0x12000, scoped, tag = 'internal scratch']
  %s0 = inlined_call_operand.hbm [shape: f32[2,1,128], index: 0, kind: input, shape index: {}]
  %s1 = inlined_call_operand.vmem [shape: f32[5,16,1], index: 1, kind: input, shape index: {}]
  %s2 = inlined_call_operand.vmem [shape: f32[16,128], index: 2, kind: input, shape index: {}]
  %s3 = inlined_call_operand.vmem [shape: f32[5,16,16], index: 3, kind: input, shape index: {}]
  %s4 = inlined_call_operand.hbm [shape: f32[16,128], index: 4, kind: input, shape index: {}]
  %s5 = inlined_call_operand.hbm [shape: f32[5,16,16], index: 5, kind: input, shape index: {}]
  %s6 = inlined_call_operand.hbm [shape: f32[16,128], index: 6, kind: input, shape index: {}]
  %s7 = inlined_call_operand.vmem [shape: f32[5,1,16], index: 7, kind: input, shape index: {}]
  %s8 = inlined_call_operand.vmem [shape: f32[1,128], index: 8, kind: input, shape index: {}]
  %s9 = inlined_call_operand.hbm [shape: f32[2,1,128], index: 9, kind: output, shape index: {}]
  %s10 = sld [smem:[#allocation0]]
  $region85: #{tpu_custom_call.1} parent=0
    _
  %s12 = ssub.s32 1, %s10
  %s13 = scalar_select 0, %s12, %s10
  $region1: #{tpu_custom_call.1} parent=0
    #allocation2 [shape = 'u8[1024]{0}', space=vmem, size = 0x400, scoped, tag = 'input window, operand 0']
    #allocation3 [shape = 's32[2]{0}', space=sflag, size = 0x8, scoped, tag = 'scoped memory for tpu_custom_call.1']
    #allocation4 [shape = 's32[2]{0}', space=sflag, size = 0x8, scoped, tag = 'scoped memory for tpu_custom_call.1']
    #allocation5 [shape = 'u8[8192]{0}', space=vmem, size = 0x2000, scoped, tag = 'input window, operand 4, single buffered']
    #allocation6 [shape = 's32[1]{0}', space=sflag, size = 0x4, scoped, tag = 'scoped memory for tpu_custom_call.1']
    #allocation7 [shape = 'u8[40960]{0}', space=vmem, size = 0xa000, scoped, tag = 'input window, operand 5, single buffered']
    #allocation8 [shape = 'u8[8192]{0}', space=vmem, size = 0x2000, scoped, tag = 'input window, operand 6, single buffered']
    #allocation9 [shape = 's32[1]{0}', space=sflag, size = 0x4, scoped, tag = 'scoped memory for tpu_custom_call.1']
    #allocation10 [shape = 'u8[1024]{0}', space=vmem, size = 0x400, scoped, tag = 'output window, operand 0']
    %14 = vsyncpa [#allocation3], 0
    %s15 = scalar_lea.sflag [#allocation3], 1
    %16 = vsyncpa %s15, 0
    %17 = vsyncpa [#allocation6], 0
    %18 = vsyncpa [#allocation9], 0
    %19 = vsyncpa [#allocation4], 0
    %s20 = scalar_lea.sflag [#allocation4], 1
    %21 = vsyncpa %s20, 0
    loop: start=0, step=1, limit=4
    $region2: #{tpu_custom_call.1} parent=1 // loop_pre_header
      _
    $region3: #{tpu_custom_call.1} parent=1 // loop_header
      %s23 = sphi 0, %s27
      %p24 = scmp.ge.s32.totalorder %s23, 4
      %s33 = sphi 0, %s35
      %s36 = sphi 0, %s33
      %s37 = sphi 0, %s36
      %s53 = sphi 0, %s37
      %s57 = sphi 0, %s57
      %s59 = sphi 0, %s57
      %s60 = sphi 0, %s59
      %s74 = sphi 0, %s60
      %s78 = sphi 0, %s78
      %s80 = sphi 0, %s78
      %s81 = sphi 0, %s80
      %s95 = sphi 0, %s81
      %s99 = sphi 0, %s99
      %s101 = sphi 0, %s99
      %s102 = sphi 0, %s101
      %s116 = sphi 0, %s102
      %s120 = sphi 0, %s120
      %s122 = sphi 0, %s120
      %s123 = sphi 0, %s122
      %s137 = sphi 0, %s123
      %s141 = sphi 0, %s141
      %s143 = sphi 0, %s141
      %s144 = sphi 0, %s143
      %s158 = sphi 0, %s144
      %s162 = sphi 0, %s162
      %s164 = sphi 0, %s162
      %s165 = sphi 0, %s164
      %s179 = sphi 0, %s165
      %s183 = sphi 0, %s183
      %s185 = sphi 0, %s183
      %s186 = sphi 0, %s185
      %s200 = sphi 0, %s186
      %s204 = sphi 0, %s204
      %s206 = sphi 0, %s204
      %s207 = sphi 0, %s206
      %s221 = sphi 0, %s207
      %s227 = sphi 0, %s229
      %s230 = sphi 0, %s227
      %s231 = sphi 0, %s230
      %s247 = sphi 0, %s231
    $region4: #{tpu_custom_call.1} parent=1 // loop_header_branch
      %26 = sbr.rel (%p24) target = $region8
    $region5: #{tpu_custom_call.1} parent=1 // loop_body
      %s28 = ssub.s32 %s23, 1
      %s29 = ssub.s32 %s23, 2
      %s30 = sadd.s32 %s23, 1
      %s31 = ssub.s32 %s23, %s30
      %p32 = scmp.eq.s32.totalorder %s31, 0
      %s34 = sadd.s32 %s33, 1
      %s35 = scalar_select %p32, %s33, %s34
      %p38 = pneg %p32
      %p39 = scmp.eq.s32.totalorder %s23, 1
      %p40 = por %p38, %p39
      %p41 = scmp.ne.s32.totalorder %s33, %s36
      %p42 = scmp.eq.s32.totalorder %s23, 0
      %p43 = por %p41, %p42
      %p44 = scmp.ne.s32.totalorder %s33, %s36
      %p45 = scmp.eq.s32.totalorder %s28, 1
      %p46 = por %p44, %p45
      %p47 = scmp.ne.s32.totalorder %s36, %s37
      %p48 = scmp.eq.s32.totalorder %s28, 0
      %p49 = por %p47, %p48
      %p50 = scmp.ne.s32.totalorder %s36, %s37
      %p51 = scmp.eq.s32.totalorder %s29, 1
      %p52 = por %p50, %p51
      %p54 = scmp.ne.s32.totalorder %s37, %s53
      %p55 = scmp.eq.s32.totalorder %s29, 0
      %p56 = por %p54, %p55
      %s58 = sadd.s32 %s57, 1
      %p61 = scmp.eq.s32.totalorder %s23, 1
      %p62 = scmp.ne.s32.totalorder %s57, %s59
      %p63 = scmp.eq.s32.totalorder %s23, 0
      %p64 = por %p62, %p63
      %p65 = scmp.ne.s32.totalorder %s57, %s59
      %p66 = scmp.eq.s32.totalorder %s28, 1
      %p67 = por %p65, %p66
      %p68 = scmp.ne.s32.totalorder %s59, %s60
      %p69 = scmp.eq.s32.totalorder %s28, 0
      %p70 = por %p68, %p69
      %p71 = scmp.ne.s32.totalorder %s59, %s60
      %p72 = scmp.eq.s32.totalorder %s29, 1
      %p73 = por %p71, %p72
      %p75 = scmp.ne.s32.totalorder %s60, %s74
      %p76 = scmp.eq.s32.totalorder %s29, 0
      %p77 = por %p75, %p76
      %s79 = sadd.s32 %s78, 1
      %p82 = scmp.eq.s32.totalorder %s23, 1
      %p83 = scmp.ne.s32.totalorder %s78, %s80
      %p84 = scmp.eq.s32.totalorder %s23, 0
      %p85 = por %p83, %p84
      %p86 = scmp.ne.s32.totalorder %s78, %s80
      %p87 = scmp.eq.s32.totalorder %s28, 1
      %p88 = por %p86, %p87
      %p89 = scmp.ne.s32.totalorder %s80, %s81
      %p90 = scmp.eq.s32.totalorder %s28, 0
      %p91 = por %p89, %p90
      %p92 = scmp.ne.s32.totalorder %s80, %s81
      %p93 = scmp.eq.s32.totalorder %s29, 1
      %p94 = por %p92, %p93
      %p96 = scmp.ne.s32.totalorder %s81, %s95
      %p97 = scmp.eq.s32.totalorder %s29, 0
      %p98 = por %p96, %p97
      %s100 = sadd.s32 %s99, 1
      %p103 = scmp.eq.s32.totalorder %s23, 1
      %p104 = scmp.ne.s32.totalorder %s99, %s101
      %p105 = scmp.eq.s32.totalorder %s23, 0
      %p106 = por %p104, %p105
      %p107 = scmp.ne.s32.totalorder %s99, %s101
      %p108 = scmp.eq.s32.totalorder %s28, 1
      %p109 = por %p107, %p108
      %p110 = scmp.ne.s32.totalorder %s101, %s102
      %p111 = scmp.eq.s32.totalorder %s28, 0
      %p112 = por %p110, %p111
      %p113 = scmp.ne.s32.totalorder %s101, %s102
      %p114 = scmp.eq.s32.totalorder %s29, 1
      %p115 = por %p113, %p114
      %p117 = scmp.ne.s32.totalorder %s102, %s116
      %p118 = scmp.eq.s32.totalorder %s29, 0
      %p119 = por %p117, %p118
      %s121 = sadd.s32 %s120, 1
      %p124 = scmp.eq.s32.totalorder %s23, 1
      %p125 = scmp.ne.s32.totalorder %s120, %s122
      %p126 = scmp.eq.s32.totalorder %s23, 0
      %p127 = por %p125, %p126
      %p128 = scmp.ne.s32.totalorder %s120, %s122
      %p129 = scmp.eq.s32.totalorder %s28, 1
      %p130 = por %p128, %p129
      %p131 = scmp.ne.s32.totalorder %s122, %s123
      %p132 = scmp.eq.s32.totalorder %s28, 0
      %p133 = por %p131, %p132
      %p134 = scmp.ne.s32.totalorder %s122, %s123
      %p135 = scmp.eq.s32.totalorder %s29, 1
      %p136 = por %p134, %p135
      %p138 = scmp.ne.s32.totalorder %s123, %s137
      %p139 = scmp.eq.s32.totalorder %s29, 0
      %p140 = por %p138, %p139
      %s142 = sadd.s32 %s141, 1
      %p145 = scmp.eq.s32.totalorder %s23, 1
      %p146 = scmp.ne.s32.totalorder %s141, %s143
      %p147 = scmp.eq.s32.totalorder %s23, 0
      %p148 = por %p146, %p147
      %p149 = scmp.ne.s32.totalorder %s141, %s143
      %p150 = scmp.eq.s32.totalorder %s28, 1
      %p151 = por %p149, %p150
      %p152 = scmp.ne.s32.totalorder %s143, %s144
      %p153 = scmp.eq.s32.totalorder %s28, 0
      %p154 = por %p152, %p153
      %p155 = scmp.ne.s32.totalorder %s143, %s144
      %p156 = scmp.eq.s32.totalorder %s29, 1
      %p157 = por %p155, %p156
      %p159 = scmp.ne.s32.totalorder %s144, %s158
      %p160 = scmp.eq.s32.totalorder %s29, 0
      %p161 = por %p159, %p160
      %s163 = sadd.s32 %s162, 1
      %p166 = scmp.eq.s32.totalorder %s23, 1
      %p167 = scmp.ne.s32.totalorder %s162, %s164
      %p168 = scmp.eq.s32.totalorder %s23, 0
      %p169 = por %p167, %p168
      %p170 = scmp.ne.s32.totalorder %s162, %s164
      %p171 = scmp.eq.s32.totalorder %s28, 1
      %p172 = por %p170, %p171
      %p173 = scmp.ne.s32.totalorder %s164, %s165
      %p174 = scmp.eq.s32.totalorder %s28, 0
      %p175 = por %p173, %p174
      %p176 = scmp.ne.s32.totalorder %s164, %s165
      %p177 = scmp.eq.s32.totalorder %s29, 1
      %p178 = por %p176, %p177
      %p180 = scmp.ne.s32.totalorder %s165, %s179
      %p181 = scmp.eq.s32.totalorder %s29, 0
      %p182 = por %p180, %p181
      %s184 = sadd.s32 %s183, 1
      %p187 = scmp.eq.s32.totalorder %s23, 1
      %p188 = scmp.ne.s32.totalorder %s183, %s185
      %p189 = scmp.eq.s32.totalorder %s23, 0
      %p190 = por %p188, %p189
      %p191 = scmp.ne.s32.totalorder %s183, %s185
      %p192 = scmp.eq.s32.totalorder %s28, 1
      %p193 = por %p191, %p192
      %p194 = scmp.ne.s32.totalorder %s185, %s186
      %p195 = scmp.eq.s32.totalorder %s28, 0
      %p196 = por %p194, %p195
      %p197 = scmp.ne.s32.totalorder %s185, %s186
      %p198 = scmp.eq.s32.totalorder %s29, 1
      %p199 = por %p197, %p198
      %p201 = scmp.ne.s32.totalorder %s186, %s200
      %p202 = scmp.eq.s32.totalorder %s29, 0
      %p203 = por %p201, %p202
      %s205 = sadd.s32 %s204, 1
      %p208 = scmp.eq.s32.totalorder %s23, 1
      %p209 = scmp.ne.s32.totalorder %s204, %s206
      %p210 = scmp.eq.s32.totalorder %s23, 0
      %p211 = por %p209, %p210
      %p212 = scmp.ne.s32.totalorder %s204, %s206
      %p213 = scmp.eq.s32.totalorder %s28, 1
      %p214 = por %p212, %p213
      %p215 = scmp.ne.s32.totalorder %s206, %s207
      %p216 = scmp.eq.s32.totalorder %s28, 0
      %p217 = por %p215, %p216
      %p218 = scmp.ne.s32.totalorder %s206, %s207
      %p219 = scmp.eq.s32.totalorder %s29, 1
      %p220 = por %p218, %p219
      %p222 = scmp.ne.s32.totalorder %s207, %s221
      %p223 = scmp.eq.s32.totalorder %s29, 0
      %p224 = por %p222, %p223
      %s225 = ssub.s32 %s23, %s30
      %p226 = scmp.eq.s32.totalorder %s225, 0
      %s228 = sadd.s32 %s227, 1
      %s229 = scalar_select %p226, %s227, %s228
      %p232 = pneg %p226
      %p233 = scmp.eq.s32.totalorder %s23, 1
      %p234 = por %p232, %p233
      %p235 = scmp.ne.s32.totalorder %s227, %s230
      %p236 = scmp.eq.s32.totalorder %s23, 0
      %p237 = por %p235, %p236
      %p238 = scmp.ne.s32.totalorder %s227, %s230
      %p239 = scmp.eq.s32.totalorder %s28, 1
      %p240 = por %p238, %p239
      %p241 = scmp.ne.s32.totalorder %s230, %s231
      %p242 = scmp.eq.s32.totalorder %s28, 0
      %p243 = por %p241, %p242
      %p244 = scmp.ne.s32.totalorder %s230, %s231
      %p245 = scmp.eq.s32.totalorder %s29, 1
      %p246 = por %p244, %p245
      %p248 = scmp.ne.s32.totalorder %s231, %s247
      %p249 = scmp.eq.s32.totalorder %s29, 0
      %p250 = por %p248, %p249
      %p251 = scmp.le.s32.totalorder 1, %s23
      %p252 = scmp.lt.s32.totalorder %s23, 3
      %p253 = pnand %p251, %p252
      %p254 = pneg %p253
      // Predicated region
      $region9: #{tpu_custom_call.1} parent=5 // pred_check
        _
      $region10: #{tpu_custom_call.1} parent=5 // pred_check_branch
        %256 = sbr.rel (%p253) target = $region12
      $region11: #{tpu_custom_call.1} parent=5 // pred_region
        %s257 = ssub.s32 %s23, 1
        // Predicated region
        $region13: #{tpu_custom_call.1} parent=11 // pred_check
          %p258 = pneg %p70
        $region14: #{tpu_custom_call.1} parent=11 // pred_check_branch
          %260 = sbr.rel (%p258) target = $region16
        $region15: #{tpu_custom_call.1} parent=11 // pred_region
          _
        $region16: #{tpu_custom_call.1} parent=11 // pred_fallthru
          _
        // Predicated region
        $region17: #{tpu_custom_call.1} parent=11 // pred_check
          %p261 = pneg %p91
        $region18: #{tpu_custom_call.1} parent=11 // pred_check_branch
          %263 = sbr.rel (%p261) target = $region20
        $region19: #{tpu_custom_call.1} parent=11 // pred_region
          _
        $region20: #{tpu_custom_call.1} parent=11 // pred_fallthru
          _
        // Predicated region
        $region21: #{tpu_custom_call.1} parent=11 // pred_check
          %p264 = pneg %p112
        $region22: #{tpu_custom_call.1} parent=11 // pred_check_branch
          %266 = sbr.rel (%p264) target = $region24
        $region23: #{tpu_custom_call.1} parent=11 // pred_region
          _
        $region24: #{tpu_custom_call.1} parent=11 // pred_fallthru
          _
        // Predicated region
        $region25: #{tpu_custom_call.1} parent=11 // pred_check
          %p267 = pneg %p133
        $region26: #{tpu_custom_call.1} parent=11 // pred_check_branch
          %269 = sbr.rel (%p267) target = $region28
        $region27: #{tpu_custom_call.1} parent=11 // pred_region
          %s271 = ssub.s32 256, 256
          %272 = vsyncadd [#allocation6], %s271
          %s273 = sshll.u32 [#allocation5], 4
          %s274 = int_to_ptr.vmem [resolvable:$true] %s273
          %279 = dma.hbm_to_vmem [thread:$0]  %s4, 256, %s274, [#allocation6], 128, 128, 8
        $region28: #{tpu_custom_call.1} parent=11 // pred_fallthru
          _
        // Predicated region
        $region29: #{tpu_custom_call.1} parent=11 // pred_check
          %p280 = pneg %p154
        $region30: #{tpu_custom_call.1} parent=11 // pred_check_branch
          %282 = sbr.rel (%p280) target = $region32
        $region31: #{tpu_custom_call.1} parent=11 // pred_region
          %s284 = ssub.s32 1280, 1280
          %285 = vsyncadd [#allocation6], %s284
          %s286 = sshll.u32 [#allocation7], 4
          %s287 = int_to_ptr.vmem [resolvable:$true] %s286
          %292 = dma.hbm_to_vmem [thread:$0]  %s5, 1280, %s287, [#allocation6], 128, 128, 8
        $region32: #{tpu_custom_call.1} parent=11 // pred_fallthru
          _
        // Predicated region
        $region33: #{tpu_custom_call.1} parent=11 // pred_check
          %p293 = pneg %p175
        $region34: #{tpu_custom_call.1} parent=11 // pred_check_branch
          %295 = sbr.rel (%p293) target = $region36
        $region35: #{tpu_custom_call.1} parent=11 // pred_region
          %s297 = ssub.s32 256, 256
          %298 = vsyncadd [#allocation9], %s297
          %s299 = sshll.u32 [#allocation8], 4
          %s300 = int_to_ptr.vmem [resolvable:$true] %s299
          %305 = dma.hbm_to_vmem [thread:$0]  %s6, 256, %s300, [#allocation9], 128, 128, 8
        $region36: #{tpu_custom_call.1} parent=11 // pred_fallthru
          _
        // Predicated region
        $region37: #{tpu_custom_call.1} parent=11 // pred_check
          %p306 = pneg %p196
        $region38: #{tpu_custom_call.1} parent=11 // pred_check_branch
          %308 = sbr.rel (%p306) target = $region40
        $region39: #{tpu_custom_call.1} parent=11 // pred_region
          _
        $region40: #{tpu_custom_call.1} parent=11 // pred_fallthru
          _
        // Predicated region
        $region41: #{tpu_custom_call.1} parent=11 // pred_check
          %p309 = pneg %p217
        $region42: #{tpu_custom_call.1} parent=11 // pred_check_branch
          %311 = sbr.rel (%p309) target = $region44
        $region43: #{tpu_custom_call.1} parent=11 // pred_region
          _
        $region44: #{tpu_custom_call.1} parent=11 // pred_fallthru
          _
      $region12: #{tpu_custom_call.1} parent=5 // pred_fallthru
        _
      %p312 = scmp.lt.s32.totalorder %s23, 2
      // Predicated region
      $region45: #{tpu_custom_call.1} parent=5 // pred_check
        %p313 = pneg %p312
      $region46: #{tpu_custom_call.1} parent=5 // pred_check_branch
        %315 = sbr.rel (%p313) target = $region48
      $region47: #{tpu_custom_call.1} parent=5 // pred_region
        // Predicated region
        $region49: #{tpu_custom_call.1} parent=47 // pred_check
          %p316 = pneg %p43
        $region50: #{tpu_custom_call.1} parent=47 // pred_check_branch
          %318 = sbr.rel (%p316) target = $region52
        $region51: #{tpu_custom_call.1} parent=47 // pred_region
          %s319 = sand.u32 %s33, 1
          %s320 = scalar_lea.sflag [#allocation3], %s319
          %s321 = sand.u32 %s33, 1
          %s322 = scalar_lea.vmem [#allocation2], %s321
          %s324 = ssub.s32 16, 16
          %325 = vsyncadd %s320, %s324
          %s326 = smul.addr %s23, 16
          %s327 = scalar_lea.hbm %s0, %s326
          %s329 = sshll.u32 %s322, 4
          %s330 = int_to_ptr.vmem [resolvable:$true] %s329
          %332 = dma.hbm_to_vmem [thread:$0]  %s327, 16, %s330, %s320
        $region52: #{tpu_custom_call.1} parent=47 // pred_fallthru
          _
      $region48: #{tpu_custom_call.1} parent=5 // pred_fallthru
        _
      %p333 = scmp.le.s32.totalorder 1, %s23
      %p334 = scmp.lt.s32.totalorder %s23, 3
      %p335 = pnand %p333, %p334
      %p336 = pneg %p335
      // Predicated region
      $region53: #{tpu_custom_call.1} parent=5 // pred_check
        _
      $region54: #{tpu_custom_call.1} parent=5 // pred_check_branch
        %338 = sbr.rel (%p335) target = $region56
      $region55: #{tpu_custom_call.1} parent=5 // pred_region
        %s339 = ssub.s32 %s23, 1
        %s340 = sand.u32 %s36, 1
        %s341 = scalar_lea.sflag [#allocation3], %s340
        %s342 = sand.u32 %s36, 1
        %s343 = scalar_lea.vmem [#allocation2], %s342
        // Predicated region
        $region57: #{tpu_custom_call.1} parent=55 // pred_check
          %p344 = pneg %p49
        $region58: #{tpu_custom_call.1} parent=55 // pred_check_branch
          %346 = sbr.rel (%p344) target = $region60
        $region59: #{tpu_custom_call.1} parent=55 // pred_region
          %347 = dma.done %s341, 16
        $region60: #{tpu_custom_call.1} parent=55 // pred_fallthru
          _
        // Predicated region
        $region61: #{tpu_custom_call.1} parent=55 // pred_check
          %p348 = pneg %p133
        $region62: #{tpu_custom_call.1} parent=55 // pred_check_branch
          %350 = sbr.rel (%p348) target = $region64
        $region63: #{tpu_custom_call.1} parent=55 // pred_region
          %351 = dma.done [#allocation6], 256
        $region64: #{tpu_custom_call.1} parent=55 // pred_fallthru
          _
        // Predicated region
        $region65: #{tpu_custom_call.1} parent=55 // pred_check
          %p352 = pneg %p154
        $region66: #{tpu_custom_call.1} parent=55 // pred_check_branch
          %354 = sbr.rel (%p352) target = $region68
        $region67: #{tpu_custom_call.1} parent=55 // pred_region
          %355 = dma.done [#allocation6], 1280
        $region68: #{tpu_custom_call.1} parent=55 // pred_fallthru
          _
        // Predicated region
        $region69: #{tpu_custom_call.1} parent=55 // pred_check
          %p356 = pneg %p175
        $region70: #{tpu_custom_call.1} parent=55 // pred_check_branch
          %358 = sbr.rel (%p356) target = $region72
        $region71: #{tpu_custom_call.1} parent=55 // pred_region
          %359 = dma.done [#allocation9], 256
        $region72: #{tpu_custom_call.1} parent=55 // pred_fallthru
          _
        %s360 = sand.u32 %s36, 1
        %s361 = scalar_lea.sflag [#allocation3], %s360
        %s362 = sand.u32 %s36, 1
        %s363 = scalar_lea.vmem [#allocation2], %s362
        %p364 = pneg %p49
        %p365 = pneg %p46
        %p366 = pneg %p70
        %p367 = pneg %p67
        %p368 = pneg %p91
        %p369 = pneg %p88
        %p370 = pneg %p112
        %p371 = pneg %p109
        %p372 = pneg %p133
        %p373 = pneg %p130
        %p374 = pneg %p154
        %p375 = pneg %p151
        %p376 = pneg %p175
        %p377 = pneg %p172
        %p378 = pneg %p196
        %p379 = pneg %p193
        %p380 = pneg %p217
        %p381 = pneg %p214
        %p382 = pneg %p243
        %p383 = pneg %p240
        %s384 = sand.u32 %s230, 1
        %s385 = scalar_lea.sflag [#allocation4], %s384
        %s386 = sand.u32 %s230, 1
        %s387 = scalar_lea.vmem [#allocation10], %s386
        %v388 = vlaneseq
        %v389 = vand.u32 %v388, 127
        %vm390 = vcmp.lt.s32.totalorder %v389, 0
        %v391 = vsub.s32 0, %v389
        %v392 = vsel %vm390, %v391, %v389
        %v393 = vshrl.u32 %v392, 4
        %v394 = vand.u32 %v392, 15
        %v395 = vsub.s32 0, %v394
        %v396 = vsel %vm390, %v395, %v394
        %vm397 = vcmp.ne.s32.totalorder %v396, 0
        %vm398 = vcmp.lt.s32.totalorder %v396, 0
        %vm399 = vmand %vm398, %vm397
        %v400 = vadd.s32 %v396, 16
        %v401 = vsel %vm399, %v400, %v396
        %v402 = vadd.s32 %v401, 4294967294
        %vm403 = vcmp.ge.s32.totalorder %v402, 0
        %vm404 = vcmp.lt.s32.totalorder %v402, 16
        %vm405 = vmand %vm403, %vm404
        %v406 = vadd.s32 %v401, 4294967295
        %vm407 = vcmp.ge.s32.totalorder %v406, 0
        %vm408 = vcmp.lt.s32.totalorder %v406, 16
        %vm409 = vmand %vm407, %vm408
        %v410 = vadd.s32 %v401, 1
        %vm411 = vcmp.ge.s32.totalorder %v410, 0
        %vm412 = vcmp.lt.s32.totalorder %v410, 16
        %vm413 = vmand %vm411, %vm412
        %v414 = vadd.s32 %v401, 2
        %vm415 = vcmp.ge.s32.totalorder %v414, 0
        %vm416 = vcmp.lt.s32.totalorder %v414, 16
        %vm417 = vmand %vm415, %vm416
        %v418 = vld [vmem:[%s343] sm:$0x1]
        %v419 = vld [vmem:[%s2] sm:$0xff]
        %v420 = vld [vmem:[%s2 + $0x8] sm:$0xff]
        %421 = vrot.lane.b32.xlu0 %v418, 2
        %v422 = vpop.permute.xlu0 %421
        %v423 = vsel %vm405, %v422, 0.0
        %v424 = vld [vmem:[%s1] sm:$0xff]
        %v425 = vld [vmem:[%s1 + $0x8] sm:$0xff]
        %427 = vset.pattern.permute.xlu0 0
        %428 = vperm.xlu0 %427, %v424
        %v429 = vpop.permute.xlu0 %428
        %432 = vset.pattern.permute.xlu0 0
        %433 = vperm.xlu0 %432, %v425
        %v434 = vpop.permute.xlu0 %433
        %v436 = vlaneseq
        %v437 = vshrl.u32 %v436, 7
        %v438 = vsub.s32 0, %v437
        %v439 = vrot.slane %v423, %v438
        %v440 = vmul.f32 %v429, %v439
        %v441 = vmul.f32 %v434, %v439
        %v442 = vadd.f32 %v419, %v440
        %v443 = vadd.f32 %v420, %v441
        %444 = vrot.lane.b32.xlu0 %v418, 1
        %v445 = vpop.permute.xlu0 %444
        %v446 = vsel %vm409, %v445, 0.0
        %s447 = scalar_lea.vmem %s1, 16
        %v448 = vld [vmem:[%s447] sm:$0xff]
        %v449 = vld [vmem:[%s447 + $0x8] sm:$0xff]
        %451 = vset.pattern.permute.xlu0 0
        %452 = vperm.xlu0 %451, %v448
        %v453 = vpop.permute.xlu0 %452
        %456 = vset.pattern.permute.xlu0 0
        %457 = vperm.xlu0 %456, %v449
        %v458 = vpop.permute.xlu0 %457
        %v460 = vlaneseq
        %v461 = vshrl.u32 %v460, 7
        %v462 = vsub.s32 0, %v461
        %v463 = vrot.slane %v446, %v462
        %v464 = vmul.f32 %v453, %v463
        %v465 = vmul.f32 %v458, %v463
        %v466 = vadd.f32 %v442, %v464
        %v467 = vadd.f32 %v443, %v465
        %s468 = scalar_lea.vmem %s1, 32
        %v469 = vld [vmem:[%s468] sm:$0xff]
        %v470 = vld [vmem:[%s468 + $0x8] sm:$0xff]
        %472 = vset.pattern.permute.xlu0 0
        %473 = vperm.xlu0 %472, %v469
        %v474 = vpop.permute.xlu0 %473
        %477 = vset.pattern.permute.xlu0 0
        %478 = vperm.xlu0 %477, %v470
        %v479 = vpop.permute.xlu0 %478
        %v482 = vlaneseq
        %v483 = vshrl.u32 %v482, 7
        %v484 = vsub.s32 0, %v483
        %v485 = vrot.slane %v418, %v484
        %v487 = vmul.f32 %v474, %v485
        %v488 = vmul.f32 %v479, %v485
        %v489 = vadd.f32 %v466, %v487
        %v490 = vadd.f32 %v467, %v488
        %491 = vrot.lane.b32.xlu0 %v418, 127
        %v492 = vpop.permute.xlu0 %491
        %v493 = vsel %vm413, %v492, 0.0
        %s494 = scalar_lea.vmem %s1, 48
        %v495 = vld [vmem:[%s494] sm:$0xff]
        %v496 = vld [vmem:[%s494 + $0x8] sm:$0xff]
        %498 = vset.pattern.permute.xlu0 0
        %499 = vperm.xlu0 %498, %v495
        %v500 = vpop.permute.xlu0 %499
        %503 = vset.pattern.permute.xlu0 0
        %504 = vperm.xlu0 %503, %v496
        %v505 = vpop.permute.xlu0 %504
        %v507 = vlaneseq
        %v508 = vshrl.u32 %v507, 7
        %v509 = vsub.s32 0, %v508
        %v510 = vrot.slane %v493, %v509
        %v511 = vmul.f32 %v500, %v510
        %v512 = vmul.f32 %v505, %v510
        %v513 = vadd.f32 %v489, %v511
        %v514 = vadd.f32 %v490, %v512
        %515 = vrot.lane.b32.xlu0 %v418, 126
        %v516 = vpop.permute.xlu0 %515
        %v517 = vsel %vm417, %v516, 0.0
        %s518 = scalar_lea.vmem %s1, 64
        %v519 = vld [vmem:[%s518] sm:$0xff]
        %v520 = vld [vmem:[%s518 + $0x8] sm:$0xff]
        %522 = vset.pattern.permute.xlu0 0
        %523 = vperm.xlu0 %522, %v519
        %v524 = vpop.permute.xlu0 %523
        %527 = vset.pattern.permute.xlu0 0
        %528 = vperm.xlu0 %527, %v520
        %v529 = vpop.permute.xlu0 %528
        %v531 = vlaneseq
        %v532 = vshrl.u32 %v531, 7
        %v533 = vsub.s32 0, %v532
        %v534 = vrot.slane %v517, %v533
        %v535 = vmul.f32 %v524, %v534
        %v536 = vmul.f32 %v529, %v534
        %v537 = vadd.f32 %v513, %v535
        %v538 = vadd.f32 %v514, %v536
        %vm539 = vcmp.ge.f32.partialorder %v537, 0.0
        %vm540 = vcmp.ge.f32.partialorder %v538, 0.0
        %v541 = vmul.f32 %v537, 0.1
        %v542 = vmul.f32 %v538, 0.1
        %v543 = vsel %vm539, %v537, %v541
        %v544 = vsel %vm540, %v538, %v542
        %v545 = vld [vmem:[#allocation5] sm:$0xff]
        %v546 = vld [vmem:[#allocation5 + $0x8] sm:$0xff]
        %547 = vrot.lane.b32.xlu0 %v543, 2
        %v548 = vpop.permute.xlu0 %547
        %549 = vrot.lane.b32.xlu0 %v544, 2
        %v550 = vpop.permute.xlu0 %549
        %v551 = vsel %vm405, 1, 0
        %vm552 = vcmp.eq.s32.totalorder %v551, 1
        %v553 = vsel %vm552, %v548, 0.0
        %v554 = vsel %vm552, %v550, 0.0
        %v555 = vld [vmem:[%s3] sm:$0xff]
        %v556 = vld [vmem:[%s3 + $0x8] sm:$0xff]
        %vm557 = vcmask 130048
        %v559 = vsel %vm557, %v555, 0
        %v562 = vsel %vm557, %v556, 0
        %564 = vmatprep.subr.mxu0 0.0
        %565 = vmatpush1.msra.mxu0 %v553
        %566 = vmatprep.subr.mxu0 0.0
        %567 = vmatpush1.msra.mxu0 %v554
        %568 = vmatprep.subr.mxu0 0.0
        %569 = vmatpush1.msra.mxu0 0.0
        %570 = vmatprep.subr.mxu0 0.0
        %571 = vmatpush1.msra.mxu0 0.0
        %572 = vmatprep.subr.mxu0 0.0
        %573 = vmatpush1.msra.mxu0 0.0
        %574 = vmatprep.subr.mxu0 0.0
        %575 = vmatpush1.msra.mxu0 0.0
        %576 = vmatprep.subr.mxu0 0.0
        %577 = vmatpush1.msra.mxu0 0.0
        %578 = vmatprep.subr.mxu0 0.0
        %579 = vmatpush1.msra.mxu0 0.0
        %580 = vmatprep.subr.mxu0 0.0
        %581 = vmatpush1.msra.mxu0 0.0
        %582 = vmatprep.subr.mxu0 0.0
        %583 = vmatpush1.msra.mxu0 0.0
        %584 = vmatprep.subr.mxu0 0.0
        %585 = vmatpush1.msra.mxu0 0.0
        %586 = vmatprep.subr.mxu0 0.0
        %587 = vmatpush1.msra.mxu0 0.0
        %588 = vmatprep.subr.mxu0 0.0
        %589 = vmatpush1.msra.mxu0 0.0
        %590 = vmatprep.subr.mxu0 0.0
        %591 = vmatpush1.msra.mxu0 0.0
        %592 = vmatprep.subr.mxu0 0.0
        %593 = vmatpush1.msra.mxu0 0.0
        %594 = vmatprep.subr.mxu0 0.0
        %595 = vmatpush1.msra.mxu0 0.0
        %596 = vmatprep.subr.mxu0 0.0
        %597 = vmatpush1.msra.mxu0 0.0
        %598 = vmatprep.subr.mxu0 0.0
        %599 = vmatpush1.msra.mxu0 0.0
        %600 = vmatprep.subr.mxu0 0.0
        %601 = vmatpush1.msra.mxu0 0.0
        %602 = vmatprep.subr.mxu0 0.0
        %603 = vmatpush1.msra.mxu0 0.0
        %604 = vmatprep.subr.mxu0 0.0
        %605 = vmatpush1.msra.mxu0 0.0
        %606 = vmatprep.subr.mxu0 0.0
        %607 = vmatpush1.msra.mxu0 0.0
        %608 = vmatprep.subr.mxu0 0.0
        %609 = vmatpush1.msra.mxu0 0.0
        %610 = vmatprep.subr.mxu0 0.0
        %611 = vmatpush1.msra.mxu0 0.0
        %612 = vmatprep.subr.mxu0 0.0
        %613 = vmatpush1.msra.mxu0 0.0
        %614 = vmatprep.subr.mxu0 0.0
        %615 = vmatpush1.msra.mxu0 0.0
        %616 = vmatprep.subr.mxu0 0.0
        %617 = vmatpush1.msra.mxu0 0.0
        %618 = vmatprep.subr.mxu0 0.0
        %619 = vmatpush1.msra.mxu0 0.0
        %620 = vmatprep.subr.mxu0 0.0
        %621 = vmatpush1.msra.mxu0 0.0
        %622 = vmatprep.subr.mxu0 0.0
        %623 = vmatpush1.msra.mxu0 0.0
        %624 = vmatprep.subr.mxu0 0.0
        %625 = vmatpush1.msra.mxu0 0.0
        %626 = vmatprep.subr.mxu0 0.0
        %627 = vmatpush1.msra.mxu0 0.0
        %628 = vmatprep.mubr.f32.mxu0 0.0
        %629 = vmatmul.mubr.f32.gmra.mrb[0].mxu0 %v559
        %v630 = vpop.f32.mrb[0].mxu0
        %v631 = vadd.f32 0.0, %v630
        %v632 = vpop.f32.mrb[0].mxu0
        %633 = vmatprep.mubr.f32.mxu0 0.0
        %634 = vmatmul.mubr.f32.gmra.mrb[0].mxu0 %v562
        %v635 = vpop.f32.mrb[0].mxu0
        %v636 = vadd.f32 0.0, %v635
        %v637 = vpop.f32.mrb[0].mxu0
        %638 = vdwg.mxu0
        %v639 = vadd.f32 %v545, %v631
        %v640 = vadd.f32 %v546, %v636
        %641 = vrot.lane.b32.xlu0 %v543, 1
        %v642 = vpop.permute.xlu0 %641
        %643 = vrot.lane.b32.xlu0 %v544, 1
        %v644 = vpop.permute.xlu0 %643
        %v645 = vsel %vm409, 1, 0
        %vm646 = vcmp.eq.s32.totalorder %v645, 1
        %v647 = vsel %vm646, %v642, 0.0
        %v648 = vsel %vm646, %v644, 0.0
        %s649 = scalar_lea.vmem %s3, 16
        %v650 = vld [vmem:[%s649] sm:$0xff]
        %v651 = vld [vmem:[%s649 + $0x8] sm:$0xff]
        %v653 = vsel %vm557, %v650, 0
        %v656 = vsel %vm557, %v651, 0
        %658 = vmatprep.subr.mxu0 0.0
        %659 = vmatpush1.msra.mxu0 %v647
        %660 = vmatprep.subr.mxu0 0.0
        %661 = vmatpush1.msra.mxu0 %v648
        %662 = vmatprep.subr.mxu0 0.0
        %663 = vmatpush1.msra.mxu0 0.0
        %664 = vmatprep.subr.mxu0 0.0
        %665 = vmatpush1.msra.mxu0 0.0
        %666 = vmatprep.subr.mxu0 0.0
        %667 = vmatpush1.msra.mxu0 0.0
        %668 = vmatprep.subr.mxu0 0.0
        %669 = vmatpush1.msra.mxu0 0.0
        %670 = vmatprep.subr.mxu0 0.0
        %671 = vmatpush1.msra.mxu0 0.0
        %672 = vmatprep.subr.mxu0 0.0
        %673 = vmatpush1.msra.mxu0 0.0
        %674 = vmatprep.subr.mxu0 0.0
        %675 = vmatpush1.msra.mxu0 0.0
        %676 = vmatprep.subr.mxu0 0.0
        %677 = vmatpush1.msra.mxu0 0.0
        %678 = vmatprep.subr.mxu0 0.0
        %679 = vmatpush1.msra.mxu0 0.0
        %680 = vmatprep.subr.mxu0 0.0
        %681 = vmatpush1.msra.mxu0 0.0
        %682 = vmatprep.subr.mxu0 0.0
        %683 = vmatpush1.msra.mxu0 0.0
        %684 = vmatprep.subr.mxu0 0.0
        %685 = vmatpush1.msra.mxu0 0.0
        %686 = vmatprep.subr.mxu0 0.0
        %687 = vmatpush1.msra.mxu0 0.0
        %688 = vmatprep.subr.mxu0 0.0
        %689 = vmatpush1.msra.mxu0 0.0
        %690 = vmatprep.subr.mxu0 0.0
        %691 = vmatpush1.msra.mxu0 0.0
        %692 = vmatprep.subr.mxu0 0.0
        %693 = vmatpush1.msra.mxu0 0.0
        %694 = vmatprep.subr.mxu0 0.0
        %695 = vmatpush1.msra.mxu0 0.0
        %696 = vmatprep.subr.mxu0 0.0
        %697 = vmatpush1.msra.mxu0 0.0
        %698 = vmatprep.subr.mxu0 0.0
        %699 = vmatpush1.msra.mxu0 0.0
        %700 = vmatprep.subr.mxu0 0.0
        %701 = vmatpush1.msra.mxu0 0.0
        %702 = vmatprep.subr.mxu0 0.0
        %703 = vmatpush1.msra.mxu0 0.0
        %704 = vmatprep.subr.mxu0 0.0
        %705 = vmatpush1.msra.mxu0 0.0
        %706 = vmatprep.subr.mxu0 0.0
        %707 = vmatpush1.msra.mxu0 0.0
        %708 = vmatprep.subr.mxu0 0.0
        %709 = vmatpush1.msra.mxu0 0.0
        %710 = vmatprep.subr.mxu0 0.0
        %711 = vmatpush1.msra.mxu0 0.0
        %712 = vmatprep.subr.mxu0 0.0
        %713 = vmatpush1.msra.mxu0 0.0
        %714 = vmatprep.subr.mxu0 0.0
        %715 = vmatpush1.msra.mxu0 0.0
        %716 = vmatprep.subr.mxu0 0.0
        %717 = vmatpush1.msra.mxu0 0.0
        %718 = vmatprep.subr.mxu0 0.0
        %719 = vmatpush1.msra.mxu0 0.0
        %720 = vmatprep.subr.mxu0 0.0
        %721 = vmatpush1.msra.mxu0 0.0
        %722 = vmatprep.mubr.f32.mxu0 0.0
        %723 = vmatmul.mubr.f32.gmra.mrb[0].mxu0 %v653
        %v724 = vpop.f32.mrb[0].mxu0
        %v725 = vadd.f32 0.0, %v724
        %v726 = vpop.f32.mrb[0].mxu0
        %727 = vmatprep.mubr.f32.mxu0 0.0
        %728 = vmatmul.mubr.f32.gmra.mrb[0].mxu0 %v656
        %v729 = vpop.f32.mrb[0].mxu0
        %v730 = vadd.f32 0.0, %v729
        %v731 = vpop.f32.mrb[0].mxu0
        %732 = vdwg.mxu0
        %v733 = vadd.f32 %v639, %v725
        %v734 = vadd.f32 %v640, %v730
        %s735 = scalar_lea.vmem %s3, 32
        %v736 = vld [vmem:[%s735] sm:$0xff]
        %v737 = vld [vmem:[%s735 + $0x8] sm:$0xff]
        %v739 = vsel %vm557, %v736, 0
        %v742 = vsel %vm557, %v737, 0
        %744 = vmatprep.subr.mxu0 0.0
        %745 = vmatpush1.msra.mxu0 %v543
        %746 = vmatprep.subr.mxu0 0.0
        %747 = vmatpush1.msra.mxu0 %v544
        %748 = vmatprep.subr.mxu0 0.0
        %749 = vmatpush1.msra.mxu0 0.0
        %750 = vmatprep.subr.mxu0 0.0
        %751 = vmatpush1.msra.mxu0 0.0
        %752 = vmatprep.subr.mxu0 0.0
        %753 = vmatpush1.msra.mxu0 0.0
        %754 = vmatprep.subr.mxu0 0.0
        %755 = vmatpush1.msra.mxu0 0.0
        %756 = vmatprep.subr.mxu0 0.0
        %757 = vmatpush1.msra.mxu0 0.0
        %758 = vmatprep.subr.mxu0 0.0
        %759 = vmatpush1.msra.mxu0 0.0
        %760 = vmatprep.subr.mxu0 0.0
        %761 = vmatpush1.msra.mxu0 0.0
        %762 = vmatprep.subr.mxu0 0.0
        %763 = vmatpush1.msra.mxu0 0.0
        %764 = vmatprep.subr.mxu0 0.0
        %765 = vmatpush1.msra.mxu0 0.0
        %766 = vmatprep.subr.mxu0 0.0
        %767 = vmatpush1.msra.mxu0 0.0
        %768 = vmatprep.subr.mxu0 0.0
        %769 = vmatpush1.msra.mxu0 0.0
        %770 = vmatprep.subr.mxu0 0.0
        %771 = vmatpush1.msra.mxu0 0.0
        %772 = vmatprep.subr.mxu0 0.0
        %773 = vmatpush1.msra.mxu0 0.0
        %774 = vmatprep.subr.mxu0 0.0
        %775 = vmatpush1.msra.mxu0 0.0
        %776 = vmatprep.subr.mxu0 0.0
        %777 = vmatpush1.msra.mxu0 0.0
        %778 = vmatprep.subr.mxu0 0.0
        %779 = vmatpush1.msra.mxu0 0.0
        %780 = vmatprep.subr.mxu0 0.0
        %781 = vmatpush1.msra.mxu0 0.0
        %782 = vmatprep.subr.mxu0 0.0
        %783 = vmatpush1.msra.mxu0 0.0
        %784 = vmatprep.subr.mxu0 0.0
        %785 = vmatpush1.msra.mxu0 0.0
        %786 = vmatprep.subr.mxu0 0.0
        %787 = vmatpush1.msra.mxu0 0.0
        %788 = vmatprep.subr.mxu0 0.0
        %789 = vmatpush1.msra.mxu0 0.0
        %790 = vmatprep.subr.mxu0 0.0
        %791 = vmatpush1.msra.mxu0 0.0
        %792 = vmatprep.subr.mxu0 0.0
        %793 = vmatpush1.msra.mxu0 0.0
        %794 = vmatprep.subr.mxu0 0.0
        %795 = vmatpush1.msra.mxu0 0.0
        %796 = vmatprep.subr.mxu0 0.0
        %797 = vmatpush1.msra.mxu0 0.0
        %798 = vmatprep.subr.mxu0 0.0
        %799 = vmatpush1.msra.mxu0 0.0
        %800 = vmatprep.subr.mxu0 0.0
        %801 = vmatpush1.msra.mxu0 0.0
        %802 = vmatprep.subr.mxu0 0.0
        %803 = vmatpush1.msra.mxu0 0.0
        %804 = vmatprep.subr.mxu0 0.0
        %805 = vmatpush1.msra.mxu0 0.0
        %806 = vmatprep.subr.mxu0 0.0
        %807 = vmatpush1.msra.mxu0 0.0
        %808 = vmatprep.mubr.f32.mxu0 0.0
        %809 = vmatmul.mubr.f32.gmra.mrb[0].mxu0 %v739
        %v810 = vpop.f32.mrb[0].mxu0
        %v811 = vadd.f32 0.0, %v810
        %v812 = vpop.f32.mrb[0].mxu0
        %813 = vmatprep.mubr.f32.mxu0 0.0
        %814 = vmatmul.mubr.f32.gmra.mrb[0].mxu0 %v742
        %v815 = vpop.f32.mrb[0].mxu0
        %v816 = vadd.f32 0.0, %v815
        %v817 = vpop.f32.mrb[0].mxu0
        %818 = vdwg.mxu0
        %v819 = vadd.f32 %v733, %v811
        %v820 = vadd.f32 %v734, %v816
        %821 = vrot.lane.b32.xlu0 %v543, 127
        %v822 = vpop.permute.xlu0 %821
        %823 = vrot.lane.b32.xlu0 %v544, 127
        %v824 = vpop.permute.xlu0 %823
        %v825 = vsel %vm413, 1, 0
        %vm826 = vcmp.eq.s32.totalorder %v825, 1
        %v827 = vsel %vm826, %v822, 0.0
        %v828 = vsel %vm826, %v824, 0.0
        %s829 = scalar_lea.vmem %s3, 48
        %v830 = vld [vmem:[%s829] sm:$0xff]
        %v831 = vld [vmem:[%s829 + $0x8] sm:$0xff]
        %v833 = vsel %vm557, %v830, 0
        %v836 = vsel %vm557, %v831, 0
        %838 = vmatprep.subr.mxu0 0.0
        %839 = vmatpush1.msra.mxu0 %v827
        %840 = vmatprep.subr.mxu0 0.0
        %841 = vmatpush1.msra.mxu0 %v828
        %842 = vmatprep.subr.mxu0 0.0
        %843 = vmatpush1.msra.mxu0 0.0
        %844 = vmatprep.subr.mxu0 0.0
        %845 = vmatpush1.msra.mxu0 0.0
        %846 = vmatprep.subr.mxu0 0.0
        %847 = vmatpush1.msra.mxu0 0.0
        %848 = vmatprep.subr.mxu0 0.0
        %849 = vmatpush1.msra.mxu0 0.0
        %850 = vmatprep.subr.mxu0 0.0
        %851 = vmatpush1.msra.mxu0 0.0
        %852 = vmatprep.subr.mxu0 0.0
        %853 = vmatpush1.msra.mxu0 0.0
        %854 = vmatprep.subr.mxu0 0.0
        %855 = vmatpush1.msra.mxu0 0.0
        %856 = vmatprep.subr.mxu0 0.0
        %857 = vmatpush1.msra.mxu0 0.0
        %858 = vmatprep.subr.mxu0 0.0
        %859 = vmatpush1.msra.mxu0 0.0
        %860 = vmatprep.subr.mxu0 0.0
        %861 = vmatpush1.msra.mxu0 0.0
        %862 = vmatprep.subr.mxu0 0.0
        %863 = vmatpush1.msra.mxu0 0.0
        %864 = vmatprep.subr.mxu0 0.0
        %865 = vmatpush1.msra.mxu0 0.0
        %866 = vmatprep.subr.mxu0 0.0
        %867 = vmatpush1.msra.mxu0 0.0
        %868 = vmatprep.subr.mxu0 0.0
        %869 = vmatpush1.msra.mxu0 0.0
        %870 = vmatprep.subr.mxu0 0.0
        %871 = vmatpush1.msra.mxu0 0.0
        %872 = vmatprep.subr.mxu0 0.0
        %873 = vmatpush1.msra.mxu0 0.0
        %874 = vmatprep.subr.mxu0 0.0
        %875 = vmatpush1.msra.mxu0 0.0
        %876 = vmatprep.subr.mxu0 0.0
        %877 = vmatpush1.msra.mxu0 0.0
        %878 = vmatprep.subr.mxu0 0.0
        %879 = vmatpush1.msra.mxu0 0.0
        %880 = vmatprep.subr.mxu0 0.0
        %881 = vmatpush1.msra.mxu0 0.0
        %882 = vmatprep.subr.mxu0 0.0
        %883 = vmatpush1.msra.mxu0 0.0
        %884 = vmatprep.subr.mxu0 0.0
        %885 = vmatpush1.msra.mxu0 0.0
        %886 = vmatprep.subr.mxu0 0.0
        %887 = vmatpush1.msra.mxu0 0.0
        %888 = vmatprep.subr.mxu0 0.0
        %889 = vmatpush1.msra.mxu0 0.0
        %890 = vmatprep.subr.mxu0 0.0
        %891 = vmatpush1.msra.mxu0 0.0
        %892 = vmatprep.subr.mxu0 0.0
        %893 = vmatpush1.msra.mxu0 0.0
        %894 = vmatprep.subr.mxu0 0.0
        %895 = vmatpush1.msra.mxu0 0.0
        %896 = vmatprep.subr.mxu0 0.0
        %897 = vmatpush1.msra.mxu0 0.0
        %898 = vmatprep.subr.mxu0 0.0
        %899 = vmatpush1.msra.mxu0 0.0
        %900 = vmatprep.subr.mxu0 0.0
        %901 = vmatpush1.msra.mxu0 0.0
        %902 = vmatprep.mubr.f32.mxu0 0.0
        %903 = vmatmul.mubr.f32.gmra.mrb[0].mxu0 %v833
        %v904 = vpop.f32.mrb[0].mxu0
        %v905 = vadd.f32 0.0, %v904
        %v906 = vpop.f32.mrb[0].mxu0
        %907 = vmatprep.mubr.f32.mxu0 0.0
        %908 = vmatmul.mubr.f32.gmra.mrb[0].mxu0 %v836
        %v909 = vpop.f32.mrb[0].mxu0
        %v910 = vadd.f32 0.0, %v909
        %v911 = vpop.f32.mrb[0].mxu0
        %912 = vdwg.mxu0
        %v913 = vadd.f32 %v819, %v905
        %v914 = vadd.f32 %v820, %v910
        %915 = vrot.lane.b32.xlu0 %v543, 126
        %v916 = vpop.permute.xlu0 %915
        %917 = vrot.lane.b32.xlu0 %v544, 126
        %v918 = vpop.permute.xlu0 %917
        %v919 = vsel %vm417, 1, 0
        %vm920 = vcmp.eq.s32.totalorder %v919, 1
        %v921 = vsel %vm920, %v916, 0.0
        %v922 = vsel %vm920, %v918, 0.0
        %s923 = scalar_lea.vmem %s3, 64
        %v924 = vld [vmem:[%s923] sm:$0xff]
        %v925 = vld [vmem:[%s923 + $0x8] sm:$0xff]
        %v927 = vsel %vm557, %v924, 0
        %v930 = vsel %vm557, %v925, 0
        %932 = vmatprep.subr.mxu0 0.0
        %933 = vmatpush1.msra.mxu0 %v921
        %934 = vmatprep.subr.mxu0 0.0
        %935 = vmatpush1.msra.mxu0 %v922
        %936 = vmatprep.subr.mxu0 0.0
        %937 = vmatpush1.msra.mxu0 0.0
        %938 = vmatprep.subr.mxu0 0.0
        %939 = vmatpush1.msra.mxu0 0.0
        %940 = vmatprep.subr.mxu0 0.0
        %941 = vmatpush1.msra.mxu0 0.0
        %942 = vmatprep.subr.mxu0 0.0
        %943 = vmatpush1.msra.mxu0 0.0
        %944 = vmatprep.subr.mxu0 0.0
        %945 = vmatpush1.msra.mxu0 0.0
        %946 = vmatprep.subr.mxu0 0.0
        %947 = vmatpush1.msra.mxu0 0.0
        %948 = vmatprep.subr.mxu0 0.0
        %949 = vmatpush1.msra.mxu0 0.0
        %950 = vmatprep.subr.mxu0 0.0
        %951 = vmatpush1.msra.mxu0 0.0
        %952 = vmatprep.subr.mxu0 0.0
        %953 = vmatpush1.msra.mxu0 0.0
        %954 = vmatprep.subr.mxu0 0.0
        %955 = vmatpush1.msra.mxu0 0.0
        %956 = vmatprep.subr.mxu0 0.0
        %957 = vmatpush1.msra.mxu0 0.0
        %958 = vmatprep.subr.mxu0 0.0
        %959 = vmatpush1.msra.mxu0 0.0
        %960 = vmatprep.subr.mxu0 0.0
        %961 = vmatpush1.msra.mxu0 0.0
        %962 = vmatprep.subr.mxu0 0.0
        %963 = vmatpush1.msra.mxu0 0.0
        %964 = vmatprep.subr.mxu0 0.0
        %965 = vmatpush1.msra.mxu0 0.0
        %966 = vmatprep.subr.mxu0 0.0
        %967 = vmatpush1.msra.mxu0 0.0
        %968 = vmatprep.subr.mxu0 0.0
        %969 = vmatpush1.msra.mxu0 0.0
        %970 = vmatprep.subr.mxu0 0.0
        %971 = vmatpush1.msra.mxu0 0.0
        %972 = vmatprep.subr.mxu0 0.0
        %973 = vmatpush1.msra.mxu0 0.0
        %974 = vmatprep.subr.mxu0 0.0
        %975 = vmatpush1.msra.mxu0 0.0
        %976 = vmatprep.subr.mxu0 0.0
        %977 = vmatpush1.msra.mxu0 0.0
        %978 = vmatprep.subr.mxu0 0.0
        %979 = vmatpush1.msra.mxu0 0.0
        %980 = vmatprep.subr.mxu0 0.0
        %981 = vmatpush1.msra.mxu0 0.0
        %982 = vmatprep.subr.mxu0 0.0
        %983 = vmatpush1.msra.mxu0 0.0
        %984 = vmatprep.subr.mxu0 0.0
        %985 = vmatpush1.msra.mxu0 0.0
        %986 = vmatprep.subr.mxu0 0.0
        %987 = vmatpush1.msra.mxu0 0.0
        %988 = vmatprep.subr.mxu0 0.0
        %989 = vmatpush1.msra.mxu0 0.0
        %990 = vmatprep.subr.mxu0 0.0
        %991 = vmatpush1.msra.mxu0 0.0
        %992 = vmatprep.subr.mxu0 0.0
        %993 = vmatpush1.msra.mxu0 0.0
        %994 = vmatprep.subr.mxu0 0.0
        %995 = vmatpush1.msra.mxu0 0.0
        %996 = vmatprep.mubr.f32.mxu0 0.0
        %997 = vmatmul.mubr.f32.gmra.mrb[0].mxu0 %v927
        %v998 = vpop.f32.mrb[0].mxu0
        %v999 = vadd.f32 0.0, %v998
        %v1000 = vpop.f32.mrb[0].mxu0
        %1001 = vmatprep.mubr.f32.mxu0 0.0
        %1002 = vmatmul.mubr.f32.gmra.mrb[0].mxu0 %v930
        %v1003 = vpop.f32.mrb[0].mxu0
        %v1004 = vadd.f32 0.0, %v1003
        %v1005 = vpop.f32.mrb[0].mxu0
        %1006 = vdwg.mxu0
        %v1007 = vadd.f32 %v913, %v999
        %v1008 = vadd.f32 %v914, %v1004
        %vm1009 = vcmp.ge.f32.partialorder %v1007, 0.0
        %vm1010 = vcmp.ge.f32.partialorder %v1008, 0.0
        %v1011 = vmul.f32 %v1007, 0.1
        %v1012 = vmul.f32 %v1008, 0.1
        %v1013 = vsel %vm1009, %v1007, %v1011
        %v1014 = vsel %vm1010, %v1008, %v1012
        %v1015 = vld [vmem:[#allocation8] sm:$0xff]
        %v1016 = vld [vmem:[#allocation8 + $0x8] sm:$0xff]
        %1017 = vrot.lane.b32.xlu0 %v1013, 2
        %v1018 = vpop.permute.xlu0 %1017
        %1019 = vrot.lane.b32.xlu0 %v1014, 2
        %v1020 = vpop.permute.xlu0 %1019
        %v1021 = vsel %vm552, %v1018, 0.0
        %v1022 = vsel %vm552, %v1020, 0.0
        %v1023 = vld [vmem:[#allocation7] sm:$0xff]
        %v1024 = vld [vmem:[#allocation7 + $0x8] sm:$0xff]
        %v1026 = vsel %vm557, %v1023, 0
        %v1029 = vsel %vm557, %v1024, 0
        %1031 = vmatprep.subr.mxu0 0.0
        %1032 = vmatpush1.msra.mxu0 %v1021
        %1033 = vmatprep.subr.mxu0 0.0
        %1034 = vmatpush1.msra.mxu0 %v1022
        %1035 = vmatprep.subr.mxu0 0.0
        %1036 = vmatpush1.msra.mxu0 0.0
        %1037 = vmatprep.subr.mxu0 0.0
        %1038 = vmatpush1.msra.mxu0 0.0
        %1039 = vmatprep.subr.mxu0 0.0
        %1040 = vmatpush1.msra.mxu0 0.0
        %1041 = vmatprep.subr.mxu0 0.0
        %1042 = vmatpush1.msra.mxu0 0.0
        %1043 = vmatprep.subr.mxu0 0.0
        %1044 = vmatpush1.msra.mxu0 0.0
        %1045 = vmatprep.subr.mxu0 0.0
        %1046 = vmatpush1.msra.mxu0 0.0
        %1047 = vmatprep.subr.mxu0 0.0
        %1048 = vmatpush1.msra.mxu0 0.0
        %1049 = vmatprep.subr.mxu0 0.0
        %1050 = vmatpush1.msra.mxu0 0.0
        %1051 = vmatprep.subr.mxu0 0.0
        %1052 = vmatpush1.msra.mxu0 0.0
        %1053 = vmatprep.subr.mxu0 0.0
        %1054 = vmatpush1.msra.mxu0 0.0
        %1055 = vmatprep.subr.mxu0 0.0
        %1056 = vmatpush1.msra.mxu0 0.0
        %1057 = vmatprep.subr.mxu0 0.0
        %1058 = vmatpush1.msra.mxu0 0.0
        %1059 = vmatprep.subr.mxu0 0.0
        %1060 = vmatpush1.msra.mxu0 0.0
        %1061 = vmatprep.subr.mxu0 0.0
        %1062 = vmatpush1.msra.mxu0 0.0
        %1063 = vmatprep.subr.mxu0 0.0
        %1064 = vmatpush1.msra.mxu0 0.0
        %1065 = vmatprep.subr.mxu0 0.0
        %1066 = vmatpush1.msra.mxu0 0.0
        %1067 = vmatprep.subr.mxu0 0.0
        %1068 = vmatpush1.msra.mxu0 0.0
        %1069 = vmatprep.subr.mxu0 0.0
        %1070 = vmatpush1.msra.mxu0 0.0
        %1071 = vmatprep.subr.mxu0 0.0
        %1072 = vmatpush1.msra.mxu0 0.0
        %1073 = vmatprep.subr.mxu0 0.0
        %1074 = vmatpush1.msra.mxu0 0.0
        %1075 = vmatprep.subr.mxu0 0.0
        %1076 = vmatpush1.msra.mxu0 0.0
        %1077 = vmatprep.subr.mxu0 0.0
        %1078 = vmatpush1.msra.mxu0 0.0
        %1079 = vmatprep.subr.mxu0 0.0
        %1080 = vmatpush1.msra.mxu0 0.0
        %1081 = vmatprep.subr.mxu0 0.0
        %1082 = vmatpush1.msra.mxu0 0.0
        %1083 = vmatprep.subr.mxu0 0.0
        %1084 = vmatpush1.msra.mxu0 0.0
        %1085 = vmatprep.subr.mxu0 0.0
        %1086 = vmatpush1.msra.mxu0 0.0
        %1087 = vmatprep.subr.mxu0 0.0
        %1088 = vmatpush1.msra.mxu0 0.0
        %1089 = vmatprep.subr.mxu0 0.0
        %1090 = vmatpush1.msra.mxu0 0.0
        %1091 = vmatprep.subr.mxu0 0.0
        %1092 = vmatpush1.msra.mxu0 0.0
        %1093 = vmatprep.subr.mxu0 0.0
        %1094 = vmatpush1.msra.mxu0 0.0
        %1095 = vmatprep.mubr.f32.mxu0 0.0
        %1096 = vmatmul.mubr.f32.gmra.mrb[0].mxu0 %v1026
        %v1097 = vpop.f32.mrb[0].mxu0
        %v1098 = vadd.f32 0.0, %v1097
        %v1099 = vpop.f32.mrb[0].mxu0
        %1100 = vmatprep.mubr.f32.mxu0 0.0
        %1101 = vmatmul.mubr.f32.gmra.mrb[0].mxu0 %v1029
        %v1102 = vpop.f32.mrb[0].mxu0
        %v1103 = vadd.f32 0.0, %v1102
        %v1104 = vpop.f32.mrb[0].mxu0
        %1105 = vdwg.mxu0
        %v1106 = vadd.f32 %v1015, %v1098
        %v1107 = vadd.f32 %v1016, %v1103
        %1108 = vrot.lane.b32.xlu0 %v1013, 1
        %v1109 = vpop.permute.xlu0 %1108
        %1110 = vrot.lane.b32.xlu0 %v1014, 1
        %v1111 = vpop.permute.xlu0 %1110
        %v1112 = vsel %vm646, %v1109, 0.0
        %v1113 = vsel %vm646, %v1111, 0.0
        %s1114 = scalar_lea.vmem [#allocation7], 16
        %v1115 = vld [vmem:[%s1114] sm:$0xff]
        %v1116 = vld [vmem:[%s1114 + $0x8] sm:$0xff]
        %v1118 = vsel %vm557, %v1115, 0
        %v1121 = vsel %vm557, %v1116, 0
        %1123 = vmatprep.subr.mxu0 0.0
        %1124 = vmatpush1.msra.mxu0 %v1112
        %1125 = vmatprep.subr.mxu0 0.0
        %1126 = vmatpush1.msra.mxu0 %v1113
        %1127 = vmatprep.subr.mxu0 0.0
        %1128 = vmatpush1.msra.mxu0 0.0
        %1129 = vmatprep.subr.mxu0 0.0
        %1130 = vmatpush1.msra.mxu0 0.0
        %1131 = vmatprep.subr.mxu0 0.0
        %1132 = vmatpush1.msra.mxu0 0.0
        %1133 = vmatprep.subr.mxu0 0.0
        %1134 = vmatpush1.msra.mxu0 0.0
        %1135 = vmatprep.subr.mxu0 0.0
        %1136 = vmatpush1.msra.mxu0 0.0
        %1137 = vmatprep.subr.mxu0 0.0
        %1138 = vmatpush1.msra.mxu0 0.0
        %1139 = vmatprep.subr.mxu0 0.0
        %1140 = vmatpush1.msra.mxu0 0.0
        %1141 = vmatprep.subr.mxu0 0.0
        %1142 = vmatpush1.msra.mxu0 0.0
        %1143 = vmatprep.subr.mxu0 0.0
        %1144 = vmatpush1.msra.mxu0 0.0
        %1145 = vmatprep.subr.mxu0 0.0
        %1146 = vmatpush1.msra.mxu0 0.0
        %1147 = vmatprep.subr.mxu0 0.0
        %1148 = vmatpush1.msra.mxu0 0.0
        %1149 = vmatprep.subr.mxu0 0.0
        %1150 = vmatpush1.msra.mxu0 0.0
        %1151 = vmatprep.subr.mxu0 0.0
        %1152 = vmatpush1.msra.mxu0 0.0
        %1153 = vmatprep.subr.mxu0 0.0
        %1154 = vmatpush1.msra.mxu0 0.0
        %1155 = vmatprep.subr.mxu0 0.0
        %1156 = vmatpush1.msra.mxu0 0.0
        %1157 = vmatprep.subr.mxu0 0.0
        %1158 = vmatpush1.msra.mxu0 0.0
        %1159 = vmatprep.subr.mxu0 0.0
        %1160 = vmatpush1.msra.mxu0 0.0
        %1161 = vmatprep.subr.mxu0 0.0
        %1162 = vmatpush1.msra.mxu0 0.0
        %1163 = vmatprep.subr.mxu0 0.0
        %1164 = vmatpush1.msra.mxu0 0.0
        %1165 = vmatprep.subr.mxu0 0.0
        %1166 = vmatpush1.msra.mxu0 0.0
        %1167 = vmatprep.subr.mxu0 0.0
        %1168 = vmatpush1.msra.mxu0 0.0
        %1169 = vmatprep.subr.mxu0 0.0
        %1170 = vmatpush1.msra.mxu0 0.0
        %1171 = vmatprep.subr.mxu0 0.0
        %1172 = vmatpush1.msra.mxu0 0.0
        %1173 = vmatprep.subr.mxu0 0.0
        %1174 = vmatpush1.msra.mxu0 0.0
        %1175 = vmatprep.subr.mxu0 0.0
        %1176 = vmatpush1.msra.mxu0 0.0
        %1177 = vmatprep.subr.mxu0 0.0
        %1178 = vmatpush1.msra.mxu0 0.0
        %1179 = vmatprep.subr.mxu0 0.0
        %1180 = vmatpush1.msra.mxu0 0.0
        %1181 = vmatprep.subr.mxu0 0.0
        %1182 = vmatpush1.msra.mxu0 0.0
        %1183 = vmatprep.subr.mxu0 0.0
        %1184 = vmatpush1.msra.mxu0 0.0
        %1185 = vmatprep.subr.mxu0 0.0
        %1186 = vmatpush1.msra.mxu0 0.0
        %1187 = vmatprep.mubr.f32.mxu0 0.0
        %1188 = vmatmul.mubr.f32.gmra.mrb[0].mxu0 %v1118
        %v1189 = vpop.f32.mrb[0].mxu0
        %v1190 = vadd.f32 0.0, %v1189
        %v1191 = vpop.f32.mrb[0].mxu0
        %1192 = vmatprep.mubr.f32.mxu0 0.0
        %1193 = vmatmul.mubr.f32.gmra.mrb[0].mxu0 %v1121
        %v1194 = vpop.f32.mrb[0].mxu0
        %v1195 = vadd.f32 0.0, %v1194
        %v1196 = vpop.f32.mrb[0].mxu0
        %1197 = vdwg.mxu0
        %v1198 = vadd.f32 %v1106, %v1190
        %v1199 = vadd.f32 %v1107, %v1195
        %s1200 = scalar_lea.vmem [#allocation7], 32
        %v1201 = vld [vmem:[%s1200] sm:$0xff]
        %v1202 = vld [vmem:[%s1200 + $0x8] sm:$0xff]
        %v1204 = vsel %vm557, %v1201, 0
        %v1207 = vsel %vm557, %v1202, 0
        %1209 = vmatprep.subr.mxu0 0.0
        %1210 = vmatpush1.msra.mxu0 %v1013
        %1211 = vmatprep.subr.mxu0 0.0
        %1212 = vmatpush1.msra.mxu0 %v1014
        %1213 = vmatprep.subr.mxu0 0.0
        %1214 = vmatpush1.msra.mxu0 0.0
        %1215 = vmatprep.subr.mxu0 0.0
        %1216 = vmatpush1.msra.mxu0 0.0
        %1217 = vmatprep.subr.mxu0 0.0
        %1218 = vmatpush1.msra.mxu0 0.0
        %1219 = vmatprep.subr.mxu0 0.0
        %1220 = vmatpush1.msra.mxu0 0.0
        %1221 = vmatprep.subr.mxu0 0.0
        %1222 = vmatpush1.msra.mxu0 0.0
        %1223 = vmatprep.subr.mxu0 0.0
        %1224 = vmatpush1.msra.mxu0 0.0
        %1225 = vmatprep.subr.mxu0 0.0
        %1226 = vmatpush1.msra.mxu0 0.0
        %1227 = vmatprep.subr.mxu0 0.0
        %1228 = vmatpush1.msra.mxu0 0.0
        %1229 = vmatprep.subr.mxu0 0.0
        %1230 = vmatpush1.msra.mxu0 0.0
        %1231 = vmatprep.subr.mxu0 0.0
        %1232 = vmatpush1.msra.mxu0 0.0
        %1233 = vmatprep.subr.mxu0 0.0
        %1234 = vmatpush1.msra.mxu0 0.0
        %1235 = vmatprep.subr.mxu0 0.0
        %1236 = vmatpush1.msra.mxu0 0.0
        %1237 = vmatprep.subr.mxu0 0.0
        %1238 = vmatpush1.msra.mxu0 0.0
        %1239 = vmatprep.subr.mxu0 0.0
        %1240 = vmatpush1.msra.mxu0 0.0
        %1241 = vmatprep.subr.mxu0 0.0
        %1242 = vmatpush1.msra.mxu0 0.0
        %1243 = vmatprep.subr.mxu0 0.0
        %1244 = vmatpush1.msra.mxu0 0.0
        %1245 = vmatprep.subr.mxu0 0.0
        %1246 = vmatpush1.msra.mxu0 0.0
        %1247 = vmatprep.subr.mxu0 0.0
        %1248 = vmatpush1.msra.mxu0 0.0
        %1249 = vmatprep.subr.mxu0 0.0
        %1250 = vmatpush1.msra.mxu0 0.0
        %1251 = vmatprep.subr.mxu0 0.0
        %1252 = vmatpush1.msra.mxu0 0.0
        %1253 = vmatprep.subr.mxu0 0.0
        %1254 = vmatpush1.msra.mxu0 0.0
        %1255 = vmatprep.subr.mxu0 0.0
        %1256 = vmatpush1.msra.mxu0 0.0
        %1257 = vmatprep.subr.mxu0 0.0
        %1258 = vmatpush1.msra.mxu0 0.0
        %1259 = vmatprep.subr.mxu0 0.0
        %1260 = vmatpush1.msra.mxu0 0.0
        %1261 = vmatprep.subr.mxu0 0.0
        %1262 = vmatpush1.msra.mxu0 0.0
        %1263 = vmatprep.subr.mxu0 0.0
        %1264 = vmatpush1.msra.mxu0 0.0
        %1265 = vmatprep.subr.mxu0 0.0
        %1266 = vmatpush1.msra.mxu0 0.0
        %1267 = vmatprep.subr.mxu0 0.0
        %1268 = vmatpush1.msra.mxu0 0.0
        %1269 = vmatprep.subr.mxu0 0.0
        %1270 = vmatpush1.msra.mxu0 0.0
        %1271 = vmatprep.subr.mxu0 0.0
        %1272 = vmatpush1.msra.mxu0 0.0
        %1273 = vmatprep.mubr.f32.mxu0 0.0
        %1274 = vmatmul.mubr.f32.gmra.mrb[0].mxu0 %v1204
        %v1275 = vpop.f32.mrb[0].mxu0
        %v1276 = vadd.f32 0.0, %v1275
        %v1277 = vpop.f32.mrb[0].mxu0
        %1278 = vmatprep.mubr.f32.mxu0 0.0
        %1279 = vmatmul.mubr.f32.gmra.mrb[0].mxu0 %v1207
        %v1280 = vpop.f32.mrb[0].mxu0
        %v1281 = vadd.f32 0.0, %v1280
        %v1282 = vpop.f32.mrb[0].mxu0
        %1283 = vdwg.mxu0
        %v1284 = vadd.f32 %v1198, %v1276
        %v1285 = vadd.f32 %v1199, %v1281
        %1286 = vrot.lane.b32.xlu0 %v1013, 127
        %v1287 = vpop.permute.xlu0 %1286
        %1288 = vrot.lane.b32.xlu0 %v1014, 127
        %v1289 = vpop.permute.xlu0 %1288
        %v1290 = vsel %vm826, %v1287, 0.0
        %v1291 = vsel %vm826, %v1289, 0.0
        %s1292 = scalar_lea.vmem [#allocation7], 48
        %v1293 = vld [vmem:[%s1292] sm:$0xff]
        %v1294 = vld [vmem:[%s1292 + $0x8] sm:$0xff]
        %v1296 = vsel %vm557, %v1293, 0
        %v1299 = vsel %vm557, %v1294, 0
        %1301 = vmatprep.subr.mxu0 0.0
        %1302 = vmatpush1.msra.mxu0 %v1290
        %1303 = vmatprep.subr.mxu0 0.0
        %1304 = vmatpush1.msra.mxu0 %v1291
        %1305 = vmatprep.subr.mxu0 0.0
        %1306 = vmatpush1.msra.mxu0 0.0
        %1307 = vmatprep.subr.mxu0 0.0
        %1308 = vmatpush1.msra.mxu0 0.0
        %1309 = vmatprep.subr.mxu0 0.0
        %1310 = vmatpush1.msra.mxu0 0.0
        %1311 = vmatprep.subr.mxu0 0.0
        %1312 = vmatpush1.msra.mxu0 0.0
        %1313 = vmatprep.subr.mxu0 0.0
        %1314 = vmatpush1.msra.mxu0 0.0
        %1315 = vmatprep.subr.mxu0 0.0
        %1316 = vmatpush1.msra.mxu0 0.0
        %1317 = vmatprep.subr.mxu0 0.0
        %1318 = vmatpush1.msra.mxu0 0.0
        %1319 = vmatprep.subr.mxu0 0.0
        %1320 = vmatpush1.msra.mxu0 0.0
        %1321 = vmatprep.subr.mxu0 0.0
        %1322 = vmatpush1.msra.mxu0 0.0
        %1323 = vmatprep.subr.mxu0 0.0
        %1324 = vmatpush1.msra.mxu0 0.0
        %1325 = vmatprep.subr.mxu0 0.0
        %1326 = vmatpush1.msra.mxu0 0.0
        %1327 = vmatprep.subr.mxu0 0.0
        %1328 = vmatpush1.msra.mxu0 0.0
        %1329 = vmatprep.subr.mxu0 0.0
        %1330 = vmatpush1.msra.mxu0 0.0
        %1331 = vmatprep.subr.mxu0 0.0
        %1332 = vmatpush1.msra.mxu0 0.0
        %1333 = vmatprep.subr.mxu0 0.0
        %1334 = vmatpush1.msra.mxu0 0.0
        %1335 = vmatprep.subr.mxu0 0.0
        %1336 = vmatpush1.msra.mxu0 0.0
        %1337 = vmatprep.subr.mxu0 0.0
        %1338 = vmatpush1.msra.mxu0 0.0
        %1339 = vmatprep.subr.mxu0 0.0
        %1340 = vmatpush1.msra.mxu0 0.0
        %1341 = vmatprep.subr.mxu0 0.0
        %1342 = vmatpush1.msra.mxu0 0.0
        %1343 = vmatprep.subr.mxu0 0.0
        %1344 = vmatpush1.msra.mxu0 0.0
        %1345 = vmatprep.subr.mxu0 0.0
        %1346 = vmatpush1.msra.mxu0 0.0
        %1347 = vmatprep.subr.mxu0 0.0
        %1348 = vmatpush1.msra.mxu0 0.0
        %1349 = vmatprep.subr.mxu0 0.0
        %1350 = vmatpush1.msra.mxu0 0.0
        %1351 = vmatprep.subr.mxu0 0.0
        %1352 = vmatpush1.msra.mxu0 0.0
        %1353 = vmatprep.subr.mxu0 0.0
        %1354 = vmatpush1.msra.mxu0 0.0
        %1355 = vmatprep.subr.mxu0 0.0
        %1356 = vmatpush1.msra.mxu0 0.0
        %1357 = vmatprep.subr.mxu0 0.0
        %1358 = vmatpush1.msra.mxu0 0.0
        %1359 = vmatprep.subr.mxu0 0.0
        %1360 = vmatpush1.msra.mxu0 0.0
        %1361 = vmatprep.subr.mxu0 0.0
        %1362 = vmatpush1.msra.mxu0 0.0
        %1363 = vmatprep.subr.mxu0 0.0
        %1364 = vmatpush1.msra.mxu0 0.0
        %1365 = vmatprep.mubr.f32.mxu0 0.0
        %1366 = vmatmul.mubr.f32.gmra.mrb[0].mxu0 %v1296
        %v1367 = vpop.f32.mrb[0].mxu0
        %v1368 = vadd.f32 0.0, %v1367
        %v1369 = vpop.f32.mrb[0].mxu0
        %1370 = vmatprep.mubr.f32.mxu0 0.0
        %1371 = vmatmul.mubr.f32.gmra.mrb[0].mxu0 %v1299
        %v1372 = vpop.f32.mrb[0].mxu0
        %v1373 = vadd.f32 0.0, %v1372
        %v1374 = vpop.f32.mrb[0].mxu0
        %1375 = vdwg.mxu0
        %v1376 = vadd.f32 %v1284, %v1368
        %v1377 = vadd.f32 %v1285, %v1373
        %1378 = vrot.lane.b32.xlu0 %v1013, 126
        %v1379 = vpop.permute.xlu0 %1378
        %1380 = vrot.lane.b32.xlu0 %v1014, 126
        %v1381 = vpop.permute.xlu0 %1380
        %v1382 = vsel %vm920, %v1379, 0.0
        %v1383 = vsel %vm920, %v1381, 0.0
        %s1384 = scalar_lea.vmem [#allocation7], 64
        %v1385 = vld [vmem:[%s1384] sm:$0xff]
        %v1386 = vld [vmem:[%s1384 + $0x8] sm:$0xff]
        %v1388 = vsel %vm557, %v1385, 0
        %v1391 = vsel %vm557, %v1386, 0
        %1393 = vmatprep.subr.mxu0 0.0
        %1394 = vmatpush1.msra.mxu0 %v1382
        %1395 = vmatprep.subr.mxu0 0.0
        %1396 = vmatpush1.msra.mxu0 %v1383
        %1397 = vmatprep.subr.mxu0 0.0
        %1398 = vmatpush1.msra.mxu0 0.0
        %1399 = vmatprep.subr.mxu0 0.0
        %1400 = vmatpush1.msra.mxu0 0.0
        %1401 = vmatprep.subr.mxu0 0.0
        %1402 = vmatpush1.msra.mxu0 0.0
        %1403 = vmatprep.subr.mxu0 0.0
        %1404 = vmatpush1.msra.mxu0 0.0
        %1405 = vmatprep.subr.mxu0 0.0
        %1406 = vmatpush1.msra.mxu0 0.0
        %1407 = vmatprep.subr.mxu0 0.0
        %1408 = vmatpush1.msra.mxu0 0.0
        %1409 = vmatprep.subr.mxu0 0.0
        %1410 = vmatpush1.msra.mxu0 0.0
        %1411 = vmatprep.subr.mxu0 0.0
        %1412 = vmatpush1.msra.mxu0 0.0
        %1413 = vmatprep.subr.mxu0 0.0
        %1414 = vmatpush1.msra.mxu0 0.0
        %1415 = vmatprep.subr.mxu0 0.0
        %1416 = vmatpush1.msra.mxu0 0.0
        %1417 = vmatprep.subr.mxu0 0.0
        %1418 = vmatpush1.msra.mxu0 0.0
        %1419 = vmatprep.subr.mxu0 0.0
        %1420 = vmatpush1.msra.mxu0 0.0
        %1421 = vmatprep.subr.mxu0 0.0
        %1422 = vmatpush1.msra.mxu0 0.0
        %1423 = vmatprep.subr.mxu0 0.0
        %1424 = vmatpush1.msra.mxu0 0.0
        %1425 = vmatprep.subr.mxu0 0.0
        %1426 = vmatpush1.msra.mxu0 0.0
        %1427 = vmatprep.subr.mxu0 0.0
        %1428 = vmatpush1.msra.mxu0 0.0
        %1429 = vmatprep.subr.mxu0 0.0
        %1430 = vmatpush1.msra.mxu0 0.0
        %1431 = vmatprep.subr.mxu0 0.0
        %1432 = vmatpush1.msra.mxu0 0.0
        %1433 = vmatprep.subr.mxu0 0.0
        %1434 = vmatpush1.msra.mxu0 0.0
        %1435 = vmatprep.subr.mxu0 0.0
        %1436 = vmatpush1.msra.mxu0 0.0
        %1437 = vmatprep.subr.mxu0 0.0
        %1438 = vmatpush1.msra.mxu0 0.0
        %1439 = vmatprep.subr.mxu0 0.0
        %1440 = vmatpush1.msra.mxu0 0.0
        %1441 = vmatprep.subr.mxu0 0.0
        %1442 = vmatpush1.msra.mxu0 0.0
        %1443 = vmatprep.subr.mxu0 0.0
        %1444 = vmatpush1.msra.mxu0 0.0
        %1445 = vmatprep.subr.mxu0 0.0
        %1446 = vmatpush1.msra.mxu0 0.0
        %1447 = vmatprep.subr.mxu0 0.0
        %1448 = vmatpush1.msra.mxu0 0.0
        %1449 = vmatprep.subr.mxu0 0.0
        %1450 = vmatpush1.msra.mxu0 0.0
        %1451 = vmatprep.subr.mxu0 0.0
        %1452 = vmatpush1.msra.mxu0 0.0
        %1453 = vmatprep.subr.mxu0 0.0
        %1454 = vmatpush1.msra.mxu0 0.0
        %1455 = vmatprep.subr.mxu0 0.0
        %1456 = vmatpush1.msra.mxu0 0.0
        %1457 = vmatprep.mubr.f32.mxu0 0.0
        %1458 = vmatmul.mubr.f32.gmra.mrb[0].mxu0 %v1388
        %v1459 = vpop.f32.mrb[0].mxu0
        %v1460 = vadd.f32 0.0, %v1459
        %v1461 = vpop.f32.mrb[0].mxu0
        %1462 = vmatprep.mubr.f32.mxu0 0.0
        %1463 = vmatmul.mubr.f32.gmra.mrb[0].mxu0 %v1391
        %v1464 = vpop.f32.mrb[0].mxu0
        %v1465 = vadd.f32 0.0, %v1464
        %v1466 = vpop.f32.mrb[0].mxu0
        %1467 = vdwg.mxu0
        %v1468 = vadd.f32 %v1376, %v1460
        %v1469 = vadd.f32 %v1377, %v1465
        %vm1470 = vcmp.ge.f32.partialorder %v1468, 0.0
        %vm1471 = vcmp.ge.f32.partialorder %v1469, 0.0
        %v1472 = vmul.f32 %v1468, 0.1
        %v1473 = vmul.f32 %v1469, 0.1
        %v1474 = vsel %vm1470, %v1468, %v1472
        %v1475 = vsel %vm1471, %v1469, %v1473
        %v1476 = vld [vmem:[%s8] sm:$0x1]
        %1477 = vrot.lane.b32.xlu0 %v1474, 2
        %v1478 = vpop.permute.xlu0 %1477
        %1479 = vrot.lane.b32.xlu0 %v1475, 2
        %v1480 = vpop.permute.xlu0 %1479
        %v1481 = vsel %vm552, %v1478, 0.0
        %v1482 = vsel %vm552, %v1480, 0.0
        %v1483 = vld [vmem:[%s7] sm:$0x1]
        %v1485 = vsel %vm557, %v1483, 0
        %1487 = vmatprep.subr.mxu0 0.0
        %1488 = vmatpush1.msra.mxu0 %v1481
        %1489 = vmatprep.subr.mxu0 0.0
        %1490 = vmatpush1.msra.mxu0 %v1482
        %1491 = vmatprep.subr.mxu0 0.0
        %1492 = vmatpush1.msra.mxu0 0.0
        %1493 = vmatprep.subr.mxu0 0.0
        %1494 = vmatpush1.msra.mxu0 0.0
        %1495 = vmatprep.subr.mxu0 0.0
        %1496 = vmatpush1.msra.mxu0 0.0
        %1497 = vmatprep.subr.mxu0 0.0
        %1498 = vmatpush1.msra.mxu0 0.0
        %1499 = vmatprep.subr.mxu0 0.0
        %1500 = vmatpush1.msra.mxu0 0.0
        %1501 = vmatprep.subr.mxu0 0.0
        %1502 = vmatpush1.msra.mxu0 0.0
        %1503 = vmatprep.subr.mxu0 0.0
        %1504 = vmatpush1.msra.mxu0 0.0
        %1505 = vmatprep.subr.mxu0 0.0
        %1506 = vmatpush1.msra.mxu0 0.0
        %1507 = vmatprep.subr.mxu0 0.0
        %1508 = vmatpush1.msra.mxu0 0.0
        %1509 = vmatprep.subr.mxu0 0.0
        %1510 = vmatpush1.msra.mxu0 0.0
        %1511 = vmatprep.subr.mxu0 0.0
        %1512 = vmatpush1.msra.mxu0 0.0
        %1513 = vmatprep.subr.mxu0 0.0
        %1514 = vmatpush1.msra.mxu0 0.0
        %1515 = vmatprep.subr.mxu0 0.0
        %1516 = vmatpush1.msra.mxu0 0.0
        %1517 = vmatprep.subr.mxu0 0.0
        %1518 = vmatpush1.msra.mxu0 0.0
        %1519 = vmatprep.subr.mxu0 0.0
        %1520 = vmatpush1.msra.mxu0 0.0
        %1521 = vmatprep.subr.mxu0 0.0
        %1522 = vmatpush1.msra.mxu0 0.0
        %1523 = vmatprep.subr.mxu0 0.0
        %1524 = vmatpush1.msra.mxu0 0.0
        %1525 = vmatprep.subr.mxu0 0.0
        %1526 = vmatpush1.msra.mxu0 0.0
        %1527 = vmatprep.subr.mxu0 0.0
        %1528 = vmatpush1.msra.mxu0 0.0
        %1529 = vmatprep.subr.mxu0 0.0
        %1530 = vmatpush1.msra.mxu0 0.0
        %1531 = vmatprep.subr.mxu0 0.0
        %1532 = vmatpush1.msra.mxu0 0.0
        %1533 = vmatprep.subr.mxu0 0.0
        %1534 = vmatpush1.msra.mxu0 0.0
        %1535 = vmatprep.subr.mxu0 0.0
        %1536 = vmatpush1.msra.mxu0 0.0
        %1537 = vmatprep.subr.mxu0 0.0
        %1538 = vmatpush1.msra.mxu0 0.0
        %1539 = vmatprep.subr.mxu0 0.0
        %1540 = vmatpush1.msra.mxu0 0.0
        %1541 = vmatprep.subr.mxu0 0.0
        %1542 = vmatpush1.msra.mxu0 0.0
        %1543 = vmatprep.subr.mxu0 0.0
        %1544 = vmatpush1.msra.mxu0 0.0
        %1545 = vmatprep.subr.mxu0 0.0
        %1546 = vmatpush1.msra.mxu0 0.0
        %1547 = vmatprep.subr.mxu0 0.0
        %1548 = vmatpush1.msra.mxu0 0.0
        %1549 = vmatprep.subr.mxu0 0.0
        %1550 = vmatpush1.msra.mxu0 0.0
        %1551 = vmatprep.mubr.f32.mxu0 0.0
        %1552 = vmatmul.mubr.f32.gmra.mrb[0].mxu0 %v1485
        %v1553 = vpop.f32.mrb[0].mxu0
        %v1554 = vadd.f32 0.0, %v1553
        %v1555 = vpop.f32.mrb[0].mxu0
        %1556 = vdwg.mxu0
        %v1557 = vadd.f32 %v1476, %v1554
        %1558 = vrot.lane.b32.xlu0 %v1474, 1
        %v1559 = vpop.permute.xlu0 %1558
        %1560 = vrot.lane.b32.xlu0 %v1475, 1
        %v1561 = vpop.permute.xlu0 %1560
        %v1562 = vsel %vm646, %v1559, 0.0
        %v1563 = vsel %vm646, %v1561, 0.0
        %s1564 = scalar_lea.vmem %s7, 1
        %v1565 = vld [vmem:[%s1564] sm:$0x1]
        %v1567 = vsel %vm557, %v1565, 0
        %1569 = vmatprep.subr.mxu0 0.0
        %1570 = vmatpush1.msra.mxu0 %v1562
        %1571 = vmatprep.subr.mxu0 0.0
        %1572 = vmatpush1.msra.mxu0 %v1563
        %1573 = vmatprep.subr.mxu0 0.0
        %1574 = vmatpush1.msra.mxu0 0.0
        %1575 = vmatprep.subr.mxu0 0.0
        %1576 = vmatpush1.msra.mxu0 0.0
        %1577 = vmatprep.subr.mxu0 0.0
        %1578 = vmatpush1.msra.mxu0 0.0
        %1579 = vmatprep.subr.mxu0 0.0
        %1580 = vmatpush1.msra.mxu0 0.0
        %1581 = vmatprep.subr.mxu0 0.0
        %1582 = vmatpush1.msra.mxu0 0.0
        %1583 = vmatprep.subr.mxu0 0.0
        %1584 = vmatpush1.msra.mxu0 0.0
        %1585 = vmatprep.subr.mxu0 0.0
        %1586 = vmatpush1.msra.mxu0 0.0
        %1587 = vmatprep.subr.mxu0 0.0
        %1588 = vmatpush1.msra.mxu0 0.0
        %1589 = vmatprep.subr.mxu0 0.0
        %1590 = vmatpush1.msra.mxu0 0.0
        %1591 = vmatprep.subr.mxu0 0.0
        %1592 = vmatpush1.msra.mxu0 0.0
        %1593 = vmatprep.subr.mxu0 0.0
        %1594 = vmatpush1.msra.mxu0 0.0
        %1595 = vmatprep.subr.mxu0 0.0
        %1596 = vmatpush1.msra.mxu0 0.0
        %1597 = vmatprep.subr.mxu0 0.0
        %1598 = vmatpush1.msra.mxu0 0.0
        %1599 = vmatprep.subr.mxu0 0.0
        %1600 = vmatpush1.msra.mxu0 0.0
        %1601 = vmatprep.subr.mxu0 0.0
        %1602 = vmatpush1.msra.mxu0 0.0
        %1603 = vmatprep.subr.mxu0 0.0
        %1604 = vmatpush1.msra.mxu0 0.0
        %1605 = vmatprep.subr.mxu0 0.0
        %1606 = vmatpush1.msra.mxu0 0.0
        %1607 = vmatprep.subr.mxu0 0.0
        %1608 = vmatpush1.msra.mxu0 0.0
        %1609 = vmatprep.subr.mxu0 0.0
        %1610 = vmatpush1.msra.mxu0 0.0
        %1611 = vmatprep.subr.mxu0 0.0
        %1612 = vmatpush1.msra.mxu0 0.0
        %1613 = vmatprep.subr.mxu0 0.0
        %1614 = vmatpush1.msra.mxu0 0.0
        %1615 = vmatprep.subr.mxu0 0.0
        %1616 = vmatpush1.msra.mxu0 0.0
        %1617 = vmatprep.subr.mxu0 0.0
        %1618 = vmatpush1.msra.mxu0 0.0
        %1619 = vmatprep.subr.mxu0 0.0
        %1620 = vmatpush1.msra.mxu0 0.0
        %1621 = vmatprep.subr.mxu0 0.0
        %1622 = vmatpush1.msra.mxu0 0.0
        %1623 = vmatprep.subr.mxu0 0.0
        %1624 = vmatpush1.msra.mxu0 0.0
        %1625 = vmatprep.subr.mxu0 0.0
        %1626 = vmatpush1.msra.mxu0 0.0
        %1627 = vmatprep.subr.mxu0 0.0
        %1628 = vmatpush1.msra.mxu0 0.0
        %1629 = vmatprep.subr.mxu0 0.0
        %1630 = vmatpush1.msra.mxu0 0.0
        %1631 = vmatprep.subr.mxu0 0.0
        %1632 = vmatpush1.msra.mxu0 0.0
        %1633 = vmatprep.mubr.f32.mxu0 0.0
        %1634 = vmatmul.mubr.f32.gmra.mrb[0].mxu0 %v1567
        %v1635 = vpop.f32.mrb[0].mxu0
        %v1636 = vadd.f32 0.0, %v1635
        %v1637 = vpop.f32.mrb[0].mxu0
        %1638 = vdwg.mxu0
        %v1639 = vadd.f32 %v1557, %v1636
        %s1640 = scalar_lea.vmem %s7, 2
        %v1641 = vld [vmem:[%s1640] sm:$0x1]
        %v1643 = vsel %vm557, %v1641, 0
        %1645 = vmatprep.subr.mxu0 0.0
        %1646 = vmatpush1.msra.mxu0 %v1474
        %1647 = vmatprep.subr.mxu0 0.0
        %1648 = vmatpush1.msra.mxu0 %v1475
        %1649 = vmatprep.subr.mxu0 0.0
        %1650 = vmatpush1.msra.mxu0 0.0
        %1651 = vmatprep.subr.mxu0 0.0
        %1652 = vmatpush1.msra.mxu0 0.0
        %1653 = vmatprep.subr.mxu0 0.0
        %1654 = vmatpush1.msra.mxu0 0.0
        %1655 = vmatprep.subr.mxu0 0.0
        %1656 = vmatpush1.msra.mxu0 0.0
        %1657 = vmatprep.subr.mxu0 0.0
        %1658 = vmatpush1.msra.mxu0 0.0
        %1659 = vmatprep.subr.mxu0 0.0
        %1660 = vmatpush1.msra.mxu0 0.0
        %1661 = vmatprep.subr.mxu0 0.0
        %1662 = vmatpush1.msra.mxu0 0.0
        %1663 = vmatprep.subr.mxu0 0.0
        %1664 = vmatpush1.msra.mxu0 0.0
        %1665 = vmatprep.subr.mxu0 0.0
        %1666 = vmatpush1.msra.mxu0 0.0
        %1667 = vmatprep.subr.mxu0 0.0
        %1668 = vmatpush1.msra.mxu0 0.0
        %1669 = vmatprep.subr.mxu0 0.0
        %1670 = vmatpush1.msra.mxu0 0.0
        %1671 = vmatprep.subr.mxu0 0.0
        %1672 = vmatpush1.msra.mxu0 0.0
        %1673 = vmatprep.subr.mxu0 0.0
        %1674 = vmatpush1.msra.mxu0 0.0
        %1675 = vmatprep.subr.mxu0 0.0
        %1676 = vmatpush1.msra.mxu0 0.0
        %1677 = vmatprep.subr.mxu0 0.0
        %1678 = vmatpush1.msra.mxu0 0.0
        %1679 = vmatprep.subr.mxu0 0.0
        %1680 = vmatpush1.msra.mxu0 0.0
        %1681 = vmatprep.subr.mxu0 0.0
        %1682 = vmatpush1.msra.mxu0 0.0
        %1683 = vmatprep.subr.mxu0 0.0
        %1684 = vmatpush1.msra.mxu0 0.0
        %1685 = vmatprep.subr.mxu0 0.0
        %1686 = vmatpush1.msra.mxu0 0.0
        %1687 = vmatprep.subr.mxu0 0.0
        %1688 = vmatpush1.msra.mxu0 0.0
        %1689 = vmatprep.subr.mxu0 0.0
        %1690 = vmatpush1.msra.mxu0 0.0
        %1691 = vmatprep.subr.mxu0 0.0
        %1692 = vmatpush1.msra.mxu0 0.0
        %1693 = vmatprep.subr.mxu0 0.0
        %1694 = vmatpush1.msra.mxu0 0.0
        %1695 = vmatprep.subr.mxu0 0.0
        %1696 = vmatpush1.msra.mxu0 0.0
        %1697 = vmatprep.subr.mxu0 0.0
        %1698 = vmatpush1.msra.mxu0 0.0
        %1699 = vmatprep.subr.mxu0 0.0
        %1700 = vmatpush1.msra.mxu0 0.0
        %1701 = vmatprep.subr.mxu0 0.0
        %1702 = vmatpush1.msra.mxu0 0.0
        %1703 = vmatprep.subr.mxu0 0.0
        %1704 = vmatpush1.msra.mxu0 0.0
        %1705 = vmatprep.subr.mxu0 0.0
        %1706 = vmatpush1.msra.mxu0 0.0
        %1707 = vmatprep.subr.mxu0 0.0
        %1708 = vmatpush1.msra.mxu0 0.0
        %1709 = vmatprep.mubr.f32.mxu0 0.0
        %1710 = vmatmul.mubr.f32.gmra.mrb[0].mxu0 %v1643
        %v1711 = vpop.f32.mrb[0].mxu0
        %v1712 = vadd.f32 0.0, %v1711
        %v1713 = vpop.f32.mrb[0].mxu0
        %1714 = vdwg.mxu0
        %v1715 = vadd.f32 %v1639, %v1712
        %1716 = vrot.lane.b32.xlu0 %v1474, 127
        %v1717 = vpop.permute.xlu0 %1716
        %1718 = vrot.lane.b32.xlu0 %v1475, 127
        %v1719 = vpop.permute.xlu0 %1718
        %v1720 = vsel %vm826, %v1717, 0.0
        %v1721 = vsel %vm826, %v1719, 0.0
        %s1722 = scalar_lea.vmem %s7, 3
        %v1723 = vld [vmem:[%s1722] sm:$0x1]
        %v1725 = vsel %vm557, %v1723, 0
        %1727 = vmatprep.subr.mxu0 0.0
        %1728 = vmatpush1.msra.mxu0 %v1720
        %1729 = vmatprep.subr.mxu0 0.0
        %1730 = vmatpush1.msra.mxu0 %v1721
        %1731 = vmatprep.subr.mxu0 0.0
        %1732 = vmatpush1.msra.mxu0 0.0
        %1733 = vmatprep.subr.mxu0 0.0
        %1734 = vmatpush1.msra.mxu0 0.0
        %1735 = vmatprep.subr.mxu0 0.0
        %1736 = vmatpush1.msra.mxu0 0.0
        %1737 = vmatprep.subr.mxu0 0.0
        %1738 = vmatpush1.msra.mxu0 0.0
        %1739 = vmatprep.subr.mxu0 0.0
        %1740 = vmatpush1.msra.mxu0 0.0
        %1741 = vmatprep.subr.mxu0 0.0
        %1742 = vmatpush1.msra.mxu0 0.0
        %1743 = vmatprep.subr.mxu0 0.0
        %1744 = vmatpush1.msra.mxu0 0.0
        %1745 = vmatprep.subr.mxu0 0.0
        %1746 = vmatpush1.msra.mxu0 0.0
        %1747 = vmatprep.subr.mxu0 0.0
        %1748 = vmatpush1.msra.mxu0 0.0
        %1749 = vmatprep.subr.mxu0 0.0
        %1750 = vmatpush1.msra.mxu0 0.0
        %1751 = vmatprep.subr.mxu0 0.0
        %1752 = vmatpush1.msra.mxu0 0.0
        %1753 = vmatprep.subr.mxu0 0.0
        %1754 = vmatpush1.msra.mxu0 0.0
        %1755 = vmatprep.subr.mxu0 0.0
        %1756 = vmatpush1.msra.mxu0 0.0
        %1757 = vmatprep.subr.mxu0 0.0
        %1758 = vmatpush1.msra.mxu0 0.0
        %1759 = vmatprep.subr.mxu0 0.0
        %1760 = vmatpush1.msra.mxu0 0.0
        %1761 = vmatprep.subr.mxu0 0.0
        %1762 = vmatpush1.msra.mxu0 0.0
        %1763 = vmatprep.subr.mxu0 0.0
        %1764 = vmatpush1.msra.mxu0 0.0
        %1765 = vmatprep.subr.mxu0 0.0
        %1766 = vmatpush1.msra.mxu0 0.0
        %1767 = vmatprep.subr.mxu0 0.0
        %1768 = vmatpush1.msra.mxu0 0.0
        %1769 = vmatprep.subr.mxu0 0.0
        %1770 = vmatpush1.msra.mxu0 0.0
        %1771 = vmatprep.subr.mxu0 0.0
        %1772 = vmatpush1.msra.mxu0 0.0
        %1773 = vmatprep.subr.mxu0 0.0
        %1774 = vmatpush1.msra.mxu0 0.0
        %1775 = vmatprep.subr.mxu0 0.0
        %1776 = vmatpush1.msra.mxu0 0.0
        %1777 = vmatprep.subr.mxu0 0.0
        %1778 = vmatpush1.msra.mxu0 0.0
        %1779 = vmatprep.subr.mxu0 0.0
        %1780 = vmatpush1.msra.mxu0 0.0
        %1781 = vmatprep.subr.mxu0 0.0
        %1782 = vmatpush1.msra.mxu0 0.0
        %1783 = vmatprep.subr.mxu0 0.0
        %1784 = vmatpush1.msra.mxu0 0.0
        %1785 = vmatprep.subr.mxu0 0.0
        %1786 = vmatpush1.msra.mxu0 0.0
        %1787 = vmatprep.subr.mxu0 0.0
        %1788 = vmatpush1.msra.mxu0 0.0
        %1789 = vmatprep.subr.mxu0 0.0
        %1790 = vmatpush1.msra.mxu0 0.0
        %1791 = vmatprep.mubr.f32.mxu0 0.0
        %1792 = vmatmul.mubr.f32.gmra.mrb[0].mxu0 %v1725
        %v1793 = vpop.f32.mrb[0].mxu0
        %v1794 = vadd.f32 0.0, %v1793
        %v1795 = vpop.f32.mrb[0].mxu0
        %1796 = vdwg.mxu0
        %v1797 = vadd.f32 %v1715, %v1794
        %1798 = vrot.lane.b32.xlu0 %v1474, 126
        %v1799 = vpop.permute.xlu0 %1798
        %1800 = vrot.lane.b32.xlu0 %v1475, 126
        %v1801 = vpop.permute.xlu0 %1800
        %v1802 = vsel %vm920, %v1799, 0.0
        %v1803 = vsel %vm920, %v1801, 0.0
        %s1804 = scalar_lea.vmem %s7, 4
        %v1805 = vld [vmem:[%s1804] sm:$0x1]
        %v1807 = vsel %vm557, %v1805, 0
        %1809 = vmatprep.subr.mxu0 0.0
        %1810 = vmatpush1.msra.mxu0 %v1802
        %1811 = vmatprep.subr.mxu0 0.0
        %1812 = vmatpush1.msra.mxu0 %v1803
        %1813 = vmatprep.subr.mxu0 0.0
        %1814 = vmatpush1.msra.mxu0 0.0
        %1815 = vmatprep.subr.mxu0 0.0
        %1816 = vmatpush1.msra.mxu0 0.0
        %1817 = vmatprep.subr.mxu0 0.0
        %1818 = vmatpush1.msra.mxu0 0.0
        %1819 = vmatprep.subr.mxu0 0.0
        %1820 = vmatpush1.msra.mxu0 0.0
        %1821 = vmatprep.subr.mxu0 0.0
        %1822 = vmatpush1.msra.mxu0 0.0
        %1823 = vmatprep.subr.mxu0 0.0
        %1824 = vmatpush1.msra.mxu0 0.0
        %1825 = vmatprep.subr.mxu0 0.0
        %1826 = vmatpush1.msra.mxu0 0.0
        %1827 = vmatprep.subr.mxu0 0.0
        %1828 = vmatpush1.msra.mxu0 0.0
        %1829 = vmatprep.subr.mxu0 0.0
        %1830 = vmatpush1.msra.mxu0 0.0
        %1831 = vmatprep.subr.mxu0 0.0
        %1832 = vmatpush1.msra.mxu0 0.0
        %1833 = vmatprep.subr.mxu0 0.0
        %1834 = vmatpush1.msra.mxu0 0.0
        %1835 = vmatprep.subr.mxu0 0.0
        %1836 = vmatpush1.msra.mxu0 0.0
        %1837 = vmatprep.subr.mxu0 0.0
        %1838 = vmatpush1.msra.mxu0 0.0
        %1839 = vmatprep.subr.mxu0 0.0
        %1840 = vmatpush1.msra.mxu0 0.0
        %1841 = vmatprep.subr.mxu0 0.0
        %1842 = vmatpush1.msra.mxu0 0.0
        %1843 = vmatprep.subr.mxu0 0.0
        %1844 = vmatpush1.msra.mxu0 0.0
        %1845 = vmatprep.subr.mxu0 0.0
        %1846 = vmatpush1.msra.mxu0 0.0
        %1847 = vmatprep.subr.mxu0 0.0
        %1848 = vmatpush1.msra.mxu0 0.0
        %1849 = vmatprep.subr.mxu0 0.0
        %1850 = vmatpush1.msra.mxu0 0.0
        %1851 = vmatprep.subr.mxu0 0.0
        %1852 = vmatpush1.msra.mxu0 0.0
        %1853 = vmatprep.subr.mxu0 0.0
        %1854 = vmatpush1.msra.mxu0 0.0
        %1855 = vmatprep.subr.mxu0 0.0
        %1856 = vmatpush1.msra.mxu0 0.0
        %1857 = vmatprep.subr.mxu0 0.0
        %1858 = vmatpush1.msra.mxu0 0.0
        %1859 = vmatprep.subr.mxu0 0.0
        %1860 = vmatpush1.msra.mxu0 0.0
        %1861 = vmatprep.subr.mxu0 0.0
        %1862 = vmatpush1.msra.mxu0 0.0
        %1863 = vmatprep.subr.mxu0 0.0
        %1864 = vmatpush1.msra.mxu0 0.0
        %1865 = vmatprep.subr.mxu0 0.0
        %1866 = vmatpush1.msra.mxu0 0.0
        %1867 = vmatprep.subr.mxu0 0.0
        %1868 = vmatpush1.msra.mxu0 0.0
        %1869 = vmatprep.subr.mxu0 0.0
        %1870 = vmatpush1.msra.mxu0 0.0
        %1871 = vmatprep.subr.mxu0 0.0
        %1872 = vmatpush1.msra.mxu0 0.0
        %1873 = vmatprep.mubr.f32.mxu0 0.0
        %1874 = vmatmul.mubr.f32.gmra.mrb[0].mxu0 %v1807
        %v1875 = vpop.f32.mrb[0].mxu0
        %v1876 = vadd.f32 0.0, %v1875
        %v1877 = vpop.f32.mrb[0].mxu0
        %1878 = vdwg.mxu0
        %v1879 = vadd.f32 %v1797, %v1876
        %1880 = vst [vmem:[%s387] sm:$0x1] %v1879
        %s1881 = sand.u32 %s230, 1
        %s1882 = scalar_lea.sflag [#allocation4], %s1881
        %s1883 = sand.u32 %s230, 1
        %s1884 = scalar_lea.vmem [#allocation10], %s1883
        // Predicated region
        $region73: #{tpu_custom_call.1} parent=55 // pred_check
          %p1885 = pneg %p240
        $region74: #{tpu_custom_call.1} parent=55 // pred_check_branch
          %1887 = sbr.rel (%p1885) target = $region76
        $region75: #{tpu_custom_call.1} parent=55 // pred_region
          %s1889 = ssub.s32 16, 16
          %1890 = vsyncadd %s1882, %s1889
          %s1891 = smul.addr %s28, 16
          %s1892 = scalar_lea.hbm %s9, %s1891
          %s1894 = sshll.u32 %s1884, 4
          %s1895 = int_to_ptr.vmem [resolvable:$true] %s1894
          %1897 = dma.vmem_to_hbm [thread:$0]  %s1895, 16, %s1892, %s1882
        $region76: #{tpu_custom_call.1} parent=55 // pred_fallthru
          _
      $region56: #{tpu_custom_call.1} parent=5 // pred_fallthru
        _
      %p1898 = scmp.le.s32.totalorder 2, %s23
      // Predicated region
      $region77: #{tpu_custom_call.1} parent=5 // pred_check
        %p1899 = pneg %p1898
      $region78: #{tpu_custom_call.1} parent=5 // pred_check_branch
        %1901 = sbr.rel (%p1899) target = $region80
      $region79: #{tpu_custom_call.1} parent=5 // pred_region
        %s1902 = ssub.s32 %s23, 2
        // Predicated region
        $region81: #{tpu_custom_call.1} parent=79 // pred_check
          %p1903 = pneg %p246
        $region82: #{tpu_custom_call.1} parent=79 // pred_check_branch
          %1905 = sbr.rel (%p1903) target = $region84
        $region83: #{tpu_custom_call.1} parent=79 // pred_region
          %s1906 = sand.u32 %s231, 1
          %s1907 = scalar_lea.sflag [#allocation4], %s1906
          %s1908 = sand.u32 %s231, 1
          %s1909 = scalar_lea.vmem [#allocation10], %s1908
          %1910 = dma.done %s1907, 16
        $region84: #{tpu_custom_call.1} parent=79 // pred_fallthru
          _
      $region80: #{tpu_custom_call.1} parent=5 // pred_fallthru
        _
    $region6: #{tpu_custom_call.1} parent=1 // loop_footer
      %s27 = sadd.s32 1, %s23
    $region7: #{tpu_custom_call.1} parent=1 // loop_footer_branch
      %22 = sbr.rel target = $region3
    $region8: #{tpu_custom_call.1} parent=1 // loop_exit
      _
    %1911 = vsyncpa [#allocation3], 1
    %s1912 = scalar_lea.sflag [#allocation3], 1
    %1913 = vsyncpa %s1912, 1
    %1914 = vsyncpa [#allocation6], 1
    %1915 = vsyncpa [#allocation9], 1
    %1916 = vsyncpa [#allocation4], 1
    %s1917 = scalar_lea.sflag [#allocation4], 1
    %1918 = vsyncpa %s1917, 1

</llo_original>
